<compile_context>
chip_gen: v7x
topology: tpu7x:2x2x1
jax: 0.10.0
libtpu: 0.0.40
codegen_flags: <defaults>
</compile_context>

<pallas_src>
import functools

import jax
import jax.numpy as jnp
from jax.experimental import pallas as pl
from jax.experimental.pallas import tpu as pltpu


# ----------------------------------------------------------------------------
# helpers
# ----------------------------------------------------------------------------
def _round_up(a, b):
    return (a + b - 1) // b * b


def _vmem_capacity_bytes():
    """Physical VMEM per core; conservative 64 MiB fallback if the query fails."""
    try:
        info = pltpu.get_tpu_info()
        cap = int(getattr(info, "vmem_capacity_bytes", 0))
        if cap > 0:
            return cap
    except Exception:
        pass
    return 64 * 1024 * 1024


# ----------------------------------------------------------------------------
# PreNorm + FeedForward + residual
# ----------------------------------------------------------------------------
def prenorm_ffn_kernel(x_ref, g_ref, b_ref, w1_ref, b1_ref, w2_ref, b2_ref,
                       o_ref, ln_ref, acc_ref, *, eps):
    k = pl.program_id(1)

    @pl.when(k == 0)
    def _init():
        xf = x_ref[...].astype(jnp.float32)
        mu = jnp.mean(xf, axis=-1, keepdims=True)
        var = jnp.mean(jnp.square(xf - mu), axis=-1, keepdims=True)
        ln = (xf - mu) * jax.lax.rsqrt(var + eps)
        ln = ln * g_ref[...].astype(jnp.float32) + b_ref[...].astype(jnp.float32)
        ln_ref[...] = ln.astype(ln_ref.dtype)          # cached LN(x) in the weights' dtype
        acc_ref[...] = jnp.zeros_like(acc_ref)

    # First linear on this hidden tile (native-dtype MXU operands, f32 accumulation).
    h = jnp.dot(ln_ref[...], w1_ref[...], preferred_element_type=jnp.float32)
    h = h + b1_ref[...].astype(jnp.float32)
    # Exact erf GELU to match nn.GELU(); approximate=True (tanh on the otherwise-idle EUP
    # slot) is nearly free but deviates ~1e-3 from PyTorch's default.
    h = jax.nn.gelu(h, approximate=False)

    # Second linear: accumulate this hidden tile's partial (tm, dim) contribution.
    acc_ref[...] += jnp.dot(h.astype(w2_ref.dtype), w2_ref[...],
                            preferred_element_type=jnp.float32)

    @pl.when(k == pl.num_programs(1) - 1)
    def _finalize():
        out = acc_ref[...] + b2_ref[...].astype(jnp.float32) + x_ref[...].astype(jnp.float32)
        o_ref[...] = out.astype(o_ref.dtype)


def prenorm_ffn(x, gamma, beta, w1, b1, w2, b2, *, tm=1024, th=1024, eps=1e-5):
    """x: (B, N, dim) -> LayerNorm -> Linear(dim,hidden) -> GELU -> Linear(hidden,dim) -> + x."""
    B, N, dim = x.shape
    hidden = w1.shape[1]
    M = B * N
    esz = x.dtype.itemsize
    wsz = w1.dtype.itemsize

    cap = _vmem_capacity_bytes()
    budget = int(cap * 0.6)          # headroom for Mosaic-internal scratch / pipelining

    # Hidden tile: lane-aligned divisor of hidden.  Larger th => fewer accumulator
    # read-modify-writes per row tile (helps v5e's single vector-store slot).
    if hidden % 128 == 0:
        th = min(max(th // 128, 1) * 128, hidden)
        while hidden % th:
            th -= 128
    else:
        th = hidden
    kh = hidden // th

    # Row tile: as large as the VMEM budget allows.  Arithmetic intensity of the
    # weight-streamed FFN is ~2*tm flop / weight byte, so a large tm is what moves the
    # k-loop off the HBM roofline on v6e/v7x; the budget check naturally shrinks it on v7x.
    sub = max(8, 32 // max(1, esz))          # sublane packing: 8 (f32), 16 (bf16), 32 (int8/fp8)
    tm = _round_up(min(tm, _round_up(M, sub)), sub)

    def footprint(tm_):
        return (4 * tm_ * dim * esz                                   # x + out (double-buffered)
                + 2 * (dim * th + th * dim + th + 3 * dim) * wsz      # streamed weight/bias/LN blocks
                + tm_ * dim * (wsz + 4))                              # LN cache + f32 accumulator

    while tm > sub and footprint(tm) > budget:
        tm = max(sub, _round_up(tm // 2, sub))

    Mp = _round_up(M, tm)
    x2 = x.reshape(M, dim)
    if Mp != M:
        x2 = jnp.pad(x2, ((0, Mp - M), (0, 0)))

    need = footprint(tm)
    vmem_limit = max(16 * 1024 * 1024, min(int(cap * 0.92), 2 * need))

    n_row_tiles = Mp // tm
    cost = pl.CostEstimate(
        flops=4 * Mp * dim * hidden,
        transcendentals=Mp * hidden,
        # activations once + weights re-streamed once per row tile
        bytes_accessed=2 * Mp * dim * esz
                       + n_row_tiles * (2 * dim * hidden + hidden + dim) * wsz,
    )

    kernel = functools.partial(prenorm_ffn_kernel, eps=eps)

    out = pl.pallas_call(
        kernel,
        out_shape=jax.ShapeDtypeStruct((Mp, dim), x.dtype),
        grid_spec=pltpu.PrefetchScalarGridSpec(
            num_scalar_prefetch=0,
            grid=(n_row_tiles, kh),
            in_specs=[
                pl.BlockSpec((tm, dim), lambda i, k: (i, 0)),   # x rows (resident across k)
                pl.BlockSpec((1, dim), lambda i, k: (0, 0)),    # LN gamma
                pl.BlockSpec((1, dim), lambda i, k: (0, 0)),    # LN beta
                pl.BlockSpec((dim, th), lambda i, k: (0, k)),   # W1 hidden tile (streamed)
                pl.BlockSpec((1, th), lambda i, k: (0, k)),     # b1 hidden tile
                pl.BlockSpec((th, dim), lambda i, k: (k, 0)),   # W2 hidden tile (streamed)
                pl.BlockSpec((1, dim), lambda i, k: (0, 0)),    # b2
            ],
            out_specs=pl.BlockSpec((tm, dim), lambda i, k: (i, 0)),
            scratch_shapes=[
                pltpu.VMEM((tm, dim), w1.dtype),       # cached LayerNorm(x) tile
                pltpu.VMEM((tm, dim), jnp.float32),    # f32 accumulator
            ],
        ),
        compiler_params=pltpu.CompilerParams(
            dimension_semantics=("parallel", "arbitrary"),
            vmem_limit_bytes=vmem_limit,
        ),
        cost_estimate=cost,
    )(x2, gamma.reshape(1, dim), beta.reshape(1, dim),
      w1, b1.reshape(1, hidden), w2, b2.reshape(1, dim))

    return out[:M].reshape(B, N, dim)


# ----------------------------------------------------------------------------
# PreNorm + Attention + residual
# ----------------------------------------------------------------------------
def prenorm_attn_kernel(x_ref, g_ref, b_ref, wqkv_ref, wo_ref, bo_ref, o_ref,
                        qkv_ref, ohead_ref, *, heads, dim_head, scale, eps):
    inner = heads * dim_head
    cdt = wqkv_ref.dtype

    xf = x_ref[0].astype(jnp.float32)                         # (N, dim)
    mu = jnp.mean(xf, axis=-1, keepdims=True)
    var = jnp.mean(jnp.square(xf - mu), axis=-1, keepdims=True)
    ln = (xf - mu) * jax.lax.rsqrt(var + eps)
    ln = ln * g_ref[...].astype(jnp.float32) + b_ref[...].astype(jnp.float32)

    # QKV projection (no bias): native-dtype MXU operands, f32 accumulation.  The softmax
    # scale is folded into Q here (N*inner multiplies) instead of scaling the (N, N) scores.
    qkv = jnp.dot(ln.astype(cdt), wqkv_ref[...], preferred_element_type=jnp.float32)
    qkv_ref[:, :inner] = (qkv[:, :inner] * scale).astype(cdt)
    qkv_ref[:, inner:] = qkv[:, inner:].astype(cdt)

    # Per-head attention.  Every per-head operand is a *ref* slice (static -> free), so vreg
    # live ranges stay bounded; head outputs are staged in VMEM so the output projection
    # below is one lane-dense (N, inner) @ (inner, dim) matmul instead of `heads` thin ones.
    # TODO(synk): for long sequences tile queries / stream K,V flash-style instead of holding
    #             the full (N, N) score matrix per head.
    for hh in range(heads):
        q_h = qkv_ref[:, hh * dim_head:(hh + 1) * dim_head]
        k_h = qkv_ref[:, inner + hh * dim_head:inner + (hh + 1) * dim_head]
        v_h = qkv_ref[:, 2 * inner + hh * dim_head:2 * inner + (hh + 1) * dim_head]

        # Contract the last axis of both operands: no explicit K transpose (XLU relayout).
        dots = jax.lax.dot_general(q_h, k_h, (((1,), (1,)), ((), ())),
                                   preferred_element_type=jnp.float32)
        dots = dots - jnp.max(dots, axis=-1, keepdims=True)
        e = jnp.exp(dots)
        s = jnp.sum(e, axis=-1, keepdims=True)
        inv = pl.reciprocal(s, approx=True)     # divide on the (idle) EUP slot, not the VALU
        inv = inv * (2.0 - s * inv)             # one Newton step: ~f32 accuracy, negligible cost
        attn = e * inv

        o_h = jnp.dot(attn.astype(cdt), v_h, preferred_element_type=jnp.float32)
        ohead_ref[:, hh * dim_head:(hh + 1) * dim_head] = o_h.astype(cdt)

    # Output projection + bias + residual, accumulated in f32.
    out = jnp.dot(ohead_ref[...], wo_ref[...], preferred_element_type=jnp.float32)
    out = out + bo_ref[...].astype(jnp.float32) + x_ref[0].astype(jnp.float32)
    o_ref[0] = out.astype(o_ref.dtype)


def prenorm_attention(x, gamma, beta, w_qkv, w_out, b_out, *, heads, dim_head, eps=1e-5):
    """x: (B, N, dim) -> LayerNorm -> multi-head attention -> output projection -> + x."""
    B, N, dim = x.shape
    inner = heads * dim_head
    scale = float(dim_head) ** -0.5
    esz = x.dtype.itemsize
    wsz = w_qkv.dtype.itemsize

    cap = _vmem_capacity_bytes()
    need = (4 * N * dim * esz                                          # x + out, double-buffered
            + 2 * (dim * 3 * inner + inner * dim + 3 * dim) * wsz      # weights / biases / LN params
            + N * (3 * inner + inner) * wsz                            # qkv + head-output scratches
            + 4 * N * (3 * inner + dim) + 4 * N * N)                   # f32 intermediates (1 head live)
    vmem_limit = max(16 * 1024 * 1024, min(int(cap * 0.92), 2 * need))

    cost = pl.CostEstimate(
        flops=2 * B * N * dim * 3 * inner + 4 * B * heads * N * N * dim_head
              + 2 * B * N * inner * dim,
        transcendentals=B * heads * N * N,
        bytes_accessed=2 * B * N * dim * esz + (3 * dim * inner + inner * dim + dim) * wsz,
    )

    kernel = functools.partial(prenorm_attn_kernel, heads=heads, dim_head=dim_head,
                               scale=scale, eps=eps)

    return pl.pallas_call(
        kernel,
        out_shape=jax.ShapeDtypeStruct((B, N, dim), x.dtype),
        grid_spec=pltpu.PrefetchScalarGridSpec(
            num_scalar_prefetch=0,
            grid=(B,),
            in_specs=[
                pl.BlockSpec((1, N, dim), lambda b: (b, 0, 0)),   # x for one batch element
                pl.BlockSpec((1, dim), lambda b: (0, 0)),         # LN gamma
                pl.BlockSpec((1, dim), lambda b: (0, 0)),         # LN beta
                # TODO(synk): on v7x, stream W_qkv/W_out over an extra "arbitrary" axis (or use
                #             pl.Buffered(1)) to avoid double-buffering full weights in 64 MiB VMEM.
                pl.BlockSpec((dim, 3 * inner), lambda b: (0, 0)), # W_qkv
                pl.BlockSpec((inner, dim), lambda b: (0, 0)),     # W_out
                pl.BlockSpec((1, dim), lambda b: (0, 0)),         # b_out
            ],
            out_specs=pl.BlockSpec((1, N, dim), lambda b: (b, 0, 0)),
            scratch_shapes=[
                pltpu.VMEM((N, 3 * inner), w_qkv.dtype),   # scaled-Q | K | V staging
                pltpu.VMEM((N, inner), w_qkv.dtype),       # concatenated head outputs
            ],
        ),
        compiler_params=pltpu.CompilerParams(
            dimension_semantics=("parallel",),
            vmem_limit_bytes=vmem_limit,
        ),
        cost_estimate=cost,
    )(x, gamma.reshape(1, dim), beta.reshape(1, dim),
      w_qkv, w_out, b_out.reshape(1, dim))


# ----------------------------------------------------------------------------
# Transformer forward (depth x [PreNorm-Attention + res, PreNorm-FFN + res])
# ----------------------------------------------------------------------------
def transformer_forward(x, layers, *, heads, dim_head):
    # TODO(synk): fuse the attention->FFN handoff (next sub-block's LayerNorm into the
    #             producer's finalize) to drop one activation HBM round trip per sub-block.
    for lyr in layers:
        x = prenorm_attention(x, lyr["attn_g"], lyr["attn_b"],
                              lyr["w_qkv"], lyr["w_out"], lyr["b_out"],
                              heads=heads, dim_head=dim_head)
        x = prenorm_ffn(x, lyr["ffn_g"], lyr["ffn_b"],
                        lyr["w1"], lyr["b1"], lyr["w2"], lyr["b2"])
    return x


# ----------------------------------------------------------------------------
# Pure-JAX reference (mirrors the PyTorch module)
# ----------------------------------------------------------------------------
def _layer_norm_ref(x, g, b, eps=1e-5):
    mu = x.mean(-1, keepdims=True)
    var = ((x - mu) ** 2).mean(-1, keepdims=True)
    return (x - mu) / jnp.sqrt(var + eps) * g + b


def _attention_ref(x, w_qkv, w_out, b_out, heads, dim_head):
    B, N, dim = x.shape
    inner = heads * dim_head
    qkv = x @ w_qkv
    q, k, v = jnp.split(qkv, 3, axis=-1)

    def rh(t):
        return t.reshape(B, N, heads, dim_head).transpose(0, 2, 1, 3)

    q, k, v = rh(q), rh(k), rh(v)
    dots = jnp.einsum("bhnd,bhmd->bhnm", q, k) * (dim_head ** -0.5)
    attn = jax.nn.softmax(dots, axis=-1)
    out = jnp.einsum("bhnm,bhmd->bhnd", attn, v)
    out = out.transpose(0, 2, 1, 3).reshape(B, N, inner)
    return out @ w_out + b_out


def _ffn_ref(x, w1, b1, w2, b2):
    h = jax.nn.gelu(x @ w1 + b1, approximate=False)
    return h @ w2 + b2


def transformer_ref(x, layers, *, heads, dim_head, eps=1e-5):
    for lyr in layers:
        h = _layer_norm_ref(x, lyr["attn_g"], lyr["attn_b"], eps)
        x = _attention_ref(h, lyr["w_qkv"], lyr["w_out"], lyr["b_out"], heads, dim_head) + x
        h = _layer_norm_ref(x, lyr["ffn_g"], lyr["ffn_b"], eps)
        x = _ffn_ref(h, lyr["w1"], lyr["b1"], lyr["w2"], lyr["b2"]) + x
    return x


# ----------------------------------------------------------------------------
# Parameter init (mimics nn.Linear / nn.LayerNorm)
# ----------------------------------------------------------------------------
def _linear_params(key, fan_in, fan_out, bias=True):
    kw, kb = jax.random.split(key)
    bound = 1.0 / (fan_in ** 0.5)
    w = jax.random.uniform(kw, (fan_in, fan_out), jnp.float32, -bound, bound)
    if not bias:
        return w, None
    b = jax.random.uniform(kb, (fan_out,), jnp.float32, -bound, bound)
    return w, b


def init_params(key, depth, dim, heads, dim_head, mlp_dim):
    inner = heads * dim_head
    layers = []
    for _ in range(depth):
        key, k1, k2, k3, k4, k5, k6, k7, k8 = jax.random.split(key, 9)
        w_qkv, _ = _linear_params(k1, dim, 3 * inner, bias=False)
        w_out, b_out = _linear_params(k2, inner, dim)
        w1, b1 = _linear_params(k3, dim, mlp_dim)
        w2, b2 = _linear_params(k4, mlp_dim, dim)
        layers.append(dict(
            attn_g=1.0 + 0.1 * jax.random.normal(k5, (dim,), jnp.float32),
            attn_b=0.05 * jax.random.normal(k6, (dim,), jnp.float32),
            ffn_g=1.0 + 0.1 * jax.random.normal(k7, (dim,), jnp.float32),
            ffn_b=0.05 * jax.random.normal(k8, (dim,), jnp.float32),
            w_qkv=w_qkv, w_out=w_out, b_out=b_out,
            w1=w1, b1=b1, w2=w2, b2=b2,
        ))
    return layers


if __name__ == "__main__":
    B, N, dim = 2, 8, 32
    heads, dim_head, mlp_dim, depth = 4, 8, 64, 2   # project_out=True (heads != 1)

    key = jax.random.PRNGKey(0)
    kx, kp = jax.random.split(key)
    x = jax.random.normal(kx, (B, N, dim), jnp.float32)
    params = init_params(kp, depth, dim, heads, dim_head, mlp_dim)

    out = transformer_forward(x, params, heads=heads, dim_head=dim_head)
    out = jax.block_until_ready(out)

    ref = transformer_ref(x, params, heads=heads, dim_head=dim_head)
    assert out.shape == (B, N, dim)
    assert jnp.allclose(out, ref, atol=2e-3, rtol=2e-3), "mismatch vs reference"

    print("KERNEL_OK")
</pallas_src>

<mosaic_0001>
module attributes {stable_mosaic.version = 11 : i64} {
  func.func @prenorm_attn_kernel(%arg0: i32, %arg1: memref<1x8x32xf32, #tpu.memory_space<vmem>>, %arg2: memref<1x32xf32, #tpu.memory_space<vmem>>, %arg3: memref<1x32xf32, #tpu.memory_space<vmem>>, %arg4: memref<32x96xf32, #tpu.memory_space<vmem>>, %arg5: memref<32x32xf32, #tpu.memory_space<vmem>>, %arg6: memref<1x32xf32, #tpu.memory_space<vmem>>, %arg7: memref<1x8x32xf32, #tpu.memory_space<vmem>>, %arg8: memref<8x96xf32, #tpu.memory_space<vmem>>, %arg9: memref<8x32xf32, #tpu.memory_space<vmem>>) attributes {dimension_semantics = [#tpu.dimension_semantics<parallel>], iteration_bounds = array<i64: 2>, scalar_prefetch = 0 : i64, scratch_operands = 2 : i64, tpu.core_type = #tpu.core_type<tc>, window_params = [{transform_indices = @transform_0, window_bounds = array<i64: 1, 8, 32>}, {pipeline_mode = #tpu.pipeline_mode<synchronous>, transform_indices = @transform_1, window_bounds = array<i64: 1, 32>}, {pipeline_mode = #tpu.pipeline_mode<synchronous>, transform_indices = @transform_2, window_bounds = array<i64: 1, 32>}, {pipeline_mode = #tpu.pipeline_mode<synchronous>, transform_indices = @transform_3, window_bounds = array<i64: 32, 96>}, {pipeline_mode = #tpu.pipeline_mode<synchronous>, transform_indices = @transform_4, window_bounds = array<i64: 32, 32>}, {pipeline_mode = #tpu.pipeline_mode<synchronous>, transform_indices = @transform_5, window_bounds = array<i64: 1, 32>}, {transform_indices = @transform_6, window_bounds = array<i64: 1, 8, 32>}]} {
    %c0 = arith.constant 0 : index
    %c0_0 = arith.constant 0 : index
    %c0_1 = arith.constant 0 : index
    %0 = vector.load %arg1[%c0, %c0_0, %c0_1] : memref<1x8x32xf32, #tpu.memory_space<vmem>>, vector<1x8x32xf32>
    %1 = vector.shape_cast %0 : vector<1x8x32xf32> to vector<8x32xf32>
    %cst = arith.constant dense<0.000000e+00> : vector<8xf32>
    %2 = vector.multi_reduction <add>, %1, %cst [1] : vector<8x32xf32> to vector<8xf32>
    %3 = vector.shape_cast %2 : vector<8xf32> to vector<8x1xf32>
    %cst_2 = arith.constant 3.200000e+01 : f32
    %4 = vector.broadcast %cst_2 : f32 to vector<8x1xf32>
    %5 = arith.divf %3, %4 : vector<8x1xf32>
    %6 = vector.broadcast %5 : vector<8x1xf32> to vector<8x32xf32>
    %7 = arith.subf %1, %6 : vector<8x32xf32>
    %8 = arith.mulf %7, %7 : vector<8x32xf32>
    %cst_3 = arith.constant dense<0.000000e+00> : vector<8xf32>
    %9 = vector.multi_reduction <add>, %8, %cst_3 [1] : vector<8x32xf32> to vector<8xf32>
    %10 = vector.shape_cast %9 : vector<8xf32> to vector<8x1xf32>
    %cst_4 = arith.constant 3.200000e+01 : f32
    %11 = vector.broadcast %cst_4 : f32 to vector<8x1xf32>
    %12 = arith.divf %10, %11 : vector<8x1xf32>
    %13 = vector.broadcast %5 : vector<8x1xf32> to vector<8x32xf32>
    %14 = arith.subf %1, %13 : vector<8x32xf32>
    %cst_5 = arith.constant 9.99999974E-6 : f32
    %15 = vector.broadcast %cst_5 : f32 to vector<8x1xf32>
    %16 = arith.addf %12, %15 : vector<8x1xf32>
    %17 = math.rsqrt %16 : vector<8x1xf32>
    %18 = vector.broadcast %17 : vector<8x1xf32> to vector<8x32xf32>
    %19 = arith.mulf %14, %18 : vector<8x32xf32>
    %c0_6 = arith.constant 0 : index
    %c0_7 = arith.constant 0 : index
    %20 = vector.load %arg2[%c0_6, %c0_7] : memref<1x32xf32, #tpu.memory_space<vmem>>, vector<1x32xf32>
    %21 = vector.broadcast %20 : vector<1x32xf32> to vector<8x32xf32>
    %22 = arith.mulf %19, %21 : vector<8x32xf32>
    %c0_8 = arith.constant 0 : index
    %c0_9 = arith.constant 0 : index
    %23 = vector.load %arg3[%c0_8, %c0_9] : memref<1x32xf32, #tpu.memory_space<vmem>>, vector<1x32xf32>
    %24 = vector.broadcast %23 : vector<1x32xf32> to vector<8x32xf32>
    %25 = arith.addf %22, %24 : vector<8x32xf32>
    %c0_10 = arith.constant 0 : index
    %c0_11 = arith.constant 0 : index
    %26 = vector.load %arg4[%c0_10, %c0_11] : memref<32x96xf32, #tpu.memory_space<vmem>>, vector<32x96xf32>
    %cst_12 = arith.constant dense<0.000000e+00> : vector<8x96xf32>
    %27 = tpu.matmul %25, %26, %cst_12 {dimension_numbers = #tpu.dot_dimension_numbers<[1], [0], [0], [1], [0, 0, 1, 1], [], []>} : vector<8x32xf32>, vector<32x96xf32>, vector<8x96xf32> -> vector<8x96xf32>
    %28 = vector.extract_strided_slice %27 {offsets = [0, 0], sizes = [8, 32], strides = [1, 1]} : vector<8x96xf32> to vector<8x32xf32>
    %cst_13 = arith.constant 0.353553385 : f32
    %29 = vector.broadcast %cst_13 : f32 to vector<8x32xf32>
    %30 = arith.mulf %28, %29 : vector<8x32xf32>
    %c0_14 = arith.constant 0 : index
    %c0_15 = arith.constant 0 : index
    %31 = vector.load %arg8[%c0_14, %c0_15] : memref<8x96xf32, #tpu.memory_space<vmem>>, vector<8x32xf32>
    tpu.vector_store %arg8[%c0_14, %c0_15], %30 {strides = array<i32>} : memref<8x96xf32, #tpu.memory_space<vmem>>, vector<8x32xf32>,
    %32 = vector.extract_strided_slice %27 {offsets = [0, 32], sizes = [8, 64], strides = [1, 1]} : vector<8x96xf32> to vector<8x64xf32>
    %c0_16 = arith.constant 0 : index
    %c32 = arith.constant 32 : index
    %33 = vector.load %arg8[%c0_16, %c32] : memref<8x96xf32, #tpu.memory_space<vmem>>, vector<8x64xf32>
    tpu.vector_store %arg8[%c0_16, %c32], %32 {strides = array<i32>} : memref<8x96xf32, #tpu.memory_space<vmem>>, vector<8x64xf32>,
    %c0_17 = arith.constant 0 : index
    %c0_18 = arith.constant 0 : index
    %34 = vector.load %arg8[%c0_17, %c0_18] : memref<8x96xf32, #tpu.memory_space<vmem>>, vector<8x8xf32>
    %c0_19 = arith.constant 0 : index
    %c32_20 = arith.constant 32 : index
    %35 = vector.load %arg8[%c0_19, %c32_20] : memref<8x96xf32, #tpu.memory_space<vmem>>, vector<8x8xf32>
    %c0_21 = arith.constant 0 : index
    %c64 = arith.constant 64 : index
    %36 = vector.load %arg8[%c0_21, %c64] : memref<8x96xf32, #tpu.memory_space<vmem>>, vector<8x8xf32>
    %cst_22 = arith.constant dense<0.000000e+00> : vector<8x8xf32>
    %37 = tpu.matmul %34, %35, %cst_22 {dimension_numbers = #tpu.dot_dimension_numbers<[1], [1], [0], [0], [0, 0, 1, 0], [], []>} : vector<8x8xf32>, vector<8x8xf32>, vector<8x8xf32> -> vector<8x8xf32>
    %cst_23 = arith.constant dense<0xFF800000> : vector<8xf32>
    %38 = vector.multi_reduction <maximumf>, %37, %cst_23 [1] : vector<8x8xf32> to vector<8xf32>
    %39 = vector.shape_cast %38 : vector<8xf32> to vector<8x1xf32>
    %40 = vector.broadcast %39 : vector<8x1xf32> to vector<8x8xf32>
    %41 = arith.subf %37, %40 : vector<8x8xf32>
    %42 = math.exp %41 : vector<8x8xf32>
    %cst_24 = arith.constant dense<0.000000e+00> : vector<8xf32>
    %43 = vector.multi_reduction <add>, %42, %cst_24 [1] : vector<8x8xf32> to vector<8xf32>
    %44 = vector.shape_cast %43 : vector<8xf32> to vector<8x1xf32>
    %45 = tpu.reciprocal %44 {approx = true} : vector<8x1xf32> -> vector<8x1xf32>
    %46 = arith.mulf %44, %45 : vector<8x1xf32>
    %cst_25 = arith.constant 2.000000e+00 : f32
    %47 = vector.broadcast %cst_25 : f32 to vector<8x1xf32>
    %48 = arith.subf %47, %46 : vector<8x1xf32>
    %49 = arith.mulf %45, %48 : vector<8x1xf32>
    %50 = vector.broadcast %49 : vector<8x1xf32> to vector<8x8xf32>
    %51 = arith.mulf %42, %50 : vector<8x8xf32>
    %cst_26 = arith.constant dense<0.000000e+00> : vector<8x8xf32>
    %52 = tpu.matmul %51, %36, %cst_26 {dimension_numbers = #tpu.dot_dimension_numbers<[1], [0], [0], [1], [0, 0, 1, 1], [], []>} : vector<8x8xf32>, vector<8x8xf32>, vector<8x8xf32> -> vector<8x8xf32>
    %c0_27 = arith.constant 0 : index
    %c0_28 = arith.constant 0 : index
    %53 = vector.load %arg9[%c0_27, %c0_28] : memref<8x32xf32, #tpu.memory_space<vmem>>, vector<8x8xf32>
    tpu.vector_store %arg9[%c0_27, %c0_28], %52 {strides = array<i32>} : memref<8x32xf32, #tpu.memory_space<vmem>>, vector<8x8xf32>,
    %c0_29 = arith.constant 0 : index
    %c8 = arith.constant 8 : index
    %54 = vector.load %arg8[%c0_29, %c8] : memref<8x96xf32, #tpu.memory_space<vmem>>, vector<8x8xf32>
    %c0_30 = arith.constant 0 : index
    %c40 = arith.constant 40 : index
    %55 = vector.load %arg8[%c0_30, %c40] : memref<8x96xf32, #tpu.memory_space<vmem>>, vector<8x8xf32>
    %c0_31 = arith.constant 0 : index
    %c72 = arith.constant 72 : index
    %56 = vector.load %arg8[%c0_31, %c72] : memref<8x96xf32, #tpu.memory_space<vmem>>, vector<8x8xf32>
    %cst_32 = arith.constant dense<0.000000e+00> : vector<8x8xf32>
    %57 = tpu.matmul %54, %55, %cst_32 {dimension_numbers = #tpu.dot_dimension_numbers<[1], [1], [0], [0], [0, 0, 1, 0], [], []>} : vector<8x8xf32>, vector<8x8xf32>, vector<8x8xf32> -> vector<8x8xf32>
    %cst_33 = arith.constant dense<0xFF800000> : vector<8xf32>
    %58 = vector.multi_reduction <maximumf>, %57, %cst_33 [1] : vector<8x8xf32> to vector<8xf32>
    %59 = vector.shape_cast %58 : vector<8xf32> to vector<8x1xf32>
    %60 = vector.broadcast %59 : vector<8x1xf32> to vector<8x8xf32>
    %61 = arith.subf %57, %60 : vector<8x8xf32>
    %62 = math.exp %61 : vector<8x8xf32>
    %cst_34 = arith.constant dense<0.000000e+00> : vector<8xf32>
    %63 = vector.multi_reduction <add>, %62, %cst_34 [1] : vector<8x8xf32> to vector<8xf32>
    %64 = vector.shape_cast %63 : vector<8xf32> to vector<8x1xf32>
    %65 = tpu.reciprocal %64 {approx = true} : vector<8x1xf32> -> vector<8x1xf32>
    %66 = arith.mulf %64, %65 : vector<8x1xf32>
    %cst_35 = arith.constant 2.000000e+00 : f32
    %67 = vector.broadcast %cst_35 : f32 to vector<8x1xf32>
    %68 = arith.subf %67, %66 : vector<8x1xf32>
    %69 = arith.mulf %65, %68 : vector<8x1xf32>
    %70 = vector.broadcast %69 : vector<8x1xf32> to vector<8x8xf32>
    %71 = arith.mulf %62, %70 : vector<8x8xf32>
    %cst_36 = arith.constant dense<0.000000e+00> : vector<8x8xf32>
    %72 = tpu.matmul %71, %56, %cst_36 {dimension_numbers = #tpu.dot_dimension_numbers<[1], [0], [0], [1], [0, 0, 1, 1], [], []>} : vector<8x8xf32>, vector<8x8xf32>, vector<8x8xf32> -> vector<8x8xf32>
    %c0_37 = arith.constant 0 : index
    %c8_38 = arith.constant 8 : index
    %73 = vector.load %arg9[%c0_37, %c8_38] : memref<8x32xf32, #tpu.memory_space<vmem>>, vector<8x8xf32>
    tpu.vector_store %arg9[%c0_37, %c8_38], %72 {strides = array<i32>} : memref<8x32xf32, #tpu.memory_space<vmem>>, vector<8x8xf32>,
    %c0_39 = arith.constant 0 : index
    %c16 = arith.constant 16 : index
    %74 = vector.load %arg8[%c0_39, %c16] : memref<8x96xf32, #tpu.memory_space<vmem>>, vector<8x8xf32>
    %c0_40 = arith.constant 0 : index
    %c48 = arith.constant 48 : index
    %75 = vector.load %arg8[%c0_40, %c48] : memref<8x96xf32, #tpu.memory_space<vmem>>, vector<8x8xf32>
    %c0_41 = arith.constant 0 : index
    %c80 = arith.constant 80 : index
    %76 = vector.load %arg8[%c0_41, %c80] : memref<8x96xf32, #tpu.memory_space<vmem>>, vector<8x8xf32>
    %cst_42 = arith.constant dense<0.000000e+00> : vector<8x8xf32>
    %77 = tpu.matmul %74, %75, %cst_42 {dimension_numbers = #tpu.dot_dimension_numbers<[1], [1], [0], [0], [0, 0, 1, 0], [], []>} : vector<8x8xf32>, vector<8x8xf32>, vector<8x8xf32> -> vector<8x8xf32>
    %cst_43 = arith.constant dense<0xFF800000> : vector<8xf32>
    %78 = vector.multi_reduction <maximumf>, %77, %cst_43 [1] : vector<8x8xf32> to vector<8xf32>
    %79 = vector.shape_cast %78 : vector<8xf32> to vector<8x1xf32>
    %80 = vector.broadcast %79 : vector<8x1xf32> to vector<8x8xf32>
    %81 = arith.subf %77, %80 : vector<8x8xf32>
    %82 = math.exp %81 : vector<8x8xf32>
    %cst_44 = arith.constant dense<0.000000e+00> : vector<8xf32>
    %83 = vector.multi_reduction <add>, %82, %cst_44 [1] : vector<8x8xf32> to vector<8xf32>
    %84 = vector.shape_cast %83 : vector<8xf32> to vector<8x1xf32>
    %85 = tpu.reciprocal %84 {approx = true} : vector<8x1xf32> -> vector<8x1xf32>
    %86 = arith.mulf %84, %85 : vector<8x1xf32>
    %cst_45 = arith.constant 2.000000e+00 : f32
    %87 = vector.broadcast %cst_45 : f32 to vector<8x1xf32>
    %88 = arith.subf %87, %86 : vector<8x1xf32>
    %89 = arith.mulf %85, %88 : vector<8x1xf32>
    %90 = vector.broadcast %89 : vector<8x1xf32> to vector<8x8xf32>
    %91 = arith.mulf %82, %90 : vector<8x8xf32>
    %cst_46 = arith.constant dense<0.000000e+00> : vector<8x8xf32>
    %92 = tpu.matmul %91, %76, %cst_46 {dimension_numbers = #tpu.dot_dimension_numbers<[1], [0], [0], [1], [0, 0, 1, 1], [], []>} : vector<8x8xf32>, vector<8x8xf32>, vector<8x8xf32> -> vector<8x8xf32>
    %c0_47 = arith.constant 0 : index
    %c16_48 = arith.constant 16 : index
    %93 = vector.load %arg9[%c0_47, %c16_48] : memref<8x32xf32, #tpu.memory_space<vmem>>, vector<8x8xf32>
    tpu.vector_store %arg9[%c0_47, %c16_48], %92 {strides = array<i32>} : memref<8x32xf32, #tpu.memory_space<vmem>>, vector<8x8xf32>,
    %c0_49 = arith.constant 0 : index
    %c24 = arith.constant 24 : index
    %94 = vector.load %arg8[%c0_49, %c24] : memref<8x96xf32, #tpu.memory_space<vmem>>, vector<8x8xf32>
    %c0_50 = arith.constant 0 : index
    %c56 = arith.constant 56 : index
    %95 = vector.load %arg8[%c0_50, %c56] : memref<8x96xf32, #tpu.memory_space<vmem>>, vector<8x8xf32>
    %c0_51 = arith.constant 0 : index
    %c88 = arith.constant 88 : index
    %96 = vector.load %arg8[%c0_51, %c88] : memref<8x96xf32, #tpu.memory_space<vmem>>, vector<8x8xf32>
    %cst_52 = arith.constant dense<0.000000e+00> : vector<8x8xf32>
    %97 = tpu.matmul %94, %95, %cst_52 {dimension_numbers = #tpu.dot_dimension_numbers<[1], [1], [0], [0], [0, 0, 1, 0], [], []>} : vector<8x8xf32>, vector<8x8xf32>, vector<8x8xf32> -> vector<8x8xf32>
    %cst_53 = arith.constant dense<0xFF800000> : vector<8xf32>
    %98 = vector.multi_reduction <maximumf>, %97, %cst_53 [1] : vector<8x8xf32> to vector<8xf32>
    %99 = vector.shape_cast %98 : vector<8xf32> to vector<8x1xf32>
    %100 = vector.broadcast %99 : vector<8x1xf32> to vector<8x8xf32>
    %101 = arith.subf %97, %100 : vector<8x8xf32>
    %102 = math.exp %101 : vector<8x8xf32>
    %cst_54 = arith.constant dense<0.000000e+00> : vector<8xf32>
    %103 = vector.multi_reduction <add>, %102, %cst_54 [1] : vector<8x8xf32> to vector<8xf32>
    %104 = vector.shape_cast %103 : vector<8xf32> to vector<8x1xf32>
    %105 = tpu.reciprocal %104 {approx = true} : vector<8x1xf32> -> vector<8x1xf32>
    %106 = arith.mulf %104, %105 : vector<8x1xf32>
    %cst_55 = arith.constant 2.000000e+00 : f32
    %107 = vector.broadcast %cst_55 : f32 to vector<8x1xf32>
    %108 = arith.subf %107, %106 : vector<8x1xf32>
    %109 = arith.mulf %105, %108 : vector<8x1xf32>
    %110 = vector.broadcast %109 : vector<8x1xf32> to vector<8x8xf32>
    %111 = arith.mulf %102, %110 : vector<8x8xf32>
    %cst_56 = arith.constant dense<0.000000e+00> : vector<8x8xf32>
    %112 = tpu.matmul %111, %96, %cst_56 {dimension_numbers = #tpu.dot_dimension_numbers<[1], [0], [0], [1], [0, 0, 1, 1], [], []>} : vector<8x8xf32>, vector<8x8xf32>, vector<8x8xf32> -> vector<8x8xf32>
    %c0_57 = arith.constant 0 : index
    %c24_58 = arith.constant 24 : index
    %113 = vector.load %arg9[%c0_57, %c24_58] : memref<8x32xf32, #tpu.memory_space<vmem>>, vector<8x8xf32>
    tpu.vector_store %arg9[%c0_57, %c24_58], %112 {strides = array<i32>} : memref<8x32xf32, #tpu.memory_space<vmem>>, vector<8x8xf32>,
    %c0_59 = arith.constant 0 : index
    %c0_60 = arith.constant 0 : index
    %114 = vector.load %arg9[%c0_59, %c0_60] : memref<8x32xf32, #tpu.memory_space<vmem>>, vector<8x32xf32>
    %c0_61 = arith.constant 0 : index
    %c0_62 = arith.constant 0 : index
    %115 = vector.load %arg5[%c0_61, %c0_62] : memref<32x32xf32, #tpu.memory_space<vmem>>, vector<32x32xf32>
    %cst_63 = arith.constant dense<0.000000e+00> : vector<8x32xf32>
    %116 = tpu.matmul %114, %115, %cst_63 {dimension_numbers = #tpu.dot_dimension_numbers<[1], [0], [0], [1], [0, 0, 1, 1], [], []>} : vector<8x32xf32>, vector<32x32xf32>, vector<8x32xf32> -> vector<8x32xf32>
    %c0_64 = arith.constant 0 : index
    %c0_65 = arith.constant 0 : index
    %117 = vector.load %arg6[%c0_64, %c0_65] : memref<1x32xf32, #tpu.memory_space<vmem>>, vector<1x32xf32>
    %118 = vector.broadcast %117 : vector<1x32xf32> to vector<8x32xf32>
    %119 = arith.addf %116, %118 : vector<8x32xf32>
    %c0_66 = arith.constant 0 : index
    %c0_67 = arith.constant 0 : index
    %c0_68 = arith.constant 0 : index
    %120 = vector.load %arg1[%c0_66, %c0_67, %c0_68] : memref<1x8x32xf32, #tpu.memory_space<vmem>>, vector<1x8x32xf32>
    %121 = vector.shape_cast %120 : vector<1x8x32xf32> to vector<8x32xf32>
    %122 = arith.addf %119, %121 : vector<8x32xf32>
    %c0_69 = arith.constant 0 : index
    %c0_70 = arith.constant 0 : index
    %c0_71 = arith.constant 0 : index
    %123 = vector.load %arg7[%c0_69, %c0_70, %c0_71] : memref<1x8x32xf32, #tpu.memory_space<vmem>>, vector<1x8x32xf32>
    %124 = vector.shape_cast %123 : vector<1x8x32xf32> to vector<8x32xf32>
    %125 = vector.shape_cast %122 : vector<8x32xf32> to vector<1x8x32xf32>
    tpu.vector_store %arg7[%c0_69, %c0_70, %c0_71], %125 {strides = array<i32>} : memref<1x8x32xf32, #tpu.memory_space<vmem>>, vector<1x8x32xf32>,
    return
  }
  func.func @transform_0(%arg0: i32) -> (i32, i32, i32) {
    %c0_i32 = arith.constant 0 : i32
    %c0_i32_0 = arith.constant 0 : i32
    %c0_i32_1 = arith.constant 0 : i32
    return %arg0, %c0_i32, %c0_i32_0 : i32, i32, i32
  }
  func.func @transform_1(%arg0: i32) -> (i32, i32) {
    %c0_i32 = arith.constant 0 : i32
    %c0_i32_0 = arith.constant 0 : i32
    %c0_i32_1 = arith.constant 0 : i32
    return %c0_i32, %c0_i32_0 : i32, i32
  }
  func.func @transform_2(%arg0: i32) -> (i32, i32) {
    %c0_i32 = arith.constant 0 : i32
    %c0_i32_0 = arith.constant 0 : i32
    %c0_i32_1 = arith.constant 0 : i32
    return %c0_i32, %c0_i32_0 : i32, i32
  }
  func.func @transform_3(%arg0: i32) -> (i32, i32) {
    %c0_i32 = arith.constant 0 : i32
    %c0_i32_0 = arith.constant 0 : i32
    %c0_i32_1 = arith.constant 0 : i32
    return %c0_i32, %c0_i32_0 : i32, i32
  }
  func.func @transform_4(%arg0: i32) -> (i32, i32) {
    %c0_i32 = arith.constant 0 : i32
    %c0_i32_0 = arith.constant 0 : i32
    %c0_i32_1 = arith.constant 0 : i32
    return %c0_i32, %c0_i32_0 : i32, i32
  }
  func.func @transform_5(%arg0: i32) -> (i32, i32) {
    %c0_i32 = arith.constant 0 : i32
    %c0_i32_0 = arith.constant 0 : i32
    %c0_i32_1 = arith.constant 0 : i32
    return %c0_i32, %c0_i32_0 : i32, i32
  }
  func.func @transform_6(%arg0: i32) -> (i32, i32, i32) {
    %c0_i32 = arith.constant 0 : i32
    %c0_i32_0 = arith.constant 0 : i32
    %c0_i32_1 = arith.constant 0 : i32
    return %arg0, %c0_i32, %c0_i32_0 : i32, i32, i32
  }
}

</mosaic_0001>

<llo_original>
// kernel: tpu_custom_call.1
$region0: #{tpu_custom_call.1}
  #allocation0 [shape = 'u32[]', space=smem, size = 0x4, offset = 0x4, fixed_abs, tag = 'smem constant byte address 0x4 - core index']
  #allocation1 [shape = 'u32[144,128]{1,0:T(1,128)}', space=vmem, size = 0x12000, scoped, tag = 'internal scratch']
  #allocation2 [shape = 'f32[8,96]{1,0:T(8,128)}', space=vmem, size = 0x1000, scoped, tag = 'scratch operand']
  #allocation3 [shape = 'f32[8,32]{1,0:T(8,128)}', space=vmem, size = 0x1000, scoped, tag = 'scratch operand']
  %s0 = inlined_call_operand.hbm [shape: f32[2,8,32], index: 0, kind: input, shape index: {}]
  %s1 = inlined_call_operand.vmem [shape: f32[1,32], index: 1, kind: input, shape index: {}]
  %s2 = inlined_call_operand.vmem [shape: f32[1,32], index: 2, kind: input, shape index: {}]
  %s3 = inlined_call_operand.hbm [shape: f32[32,96], index: 3, kind: input, shape index: {}]
  %s4 = inlined_call_operand.hbm [shape: f32[32,32], index: 4, kind: input, shape index: {}]
  %s5 = inlined_call_operand.vmem [shape: f32[1,32], index: 5, kind: input, shape index: {}]
  %s6 = inlined_call_operand.hbm [shape: f32[2,8,32], index: 6, kind: output, shape index: {}]
  %s7 = sld [smem:[#allocation0]]
  $region69: #{tpu_custom_call.1} parent=0
    _
  %s9 = ssub.s32 1, %s7
  %s10 = scalar_select 0, %s9, %s7
  $region1: #{tpu_custom_call.1} parent=0
    #allocation4 [shape = 'u8[8192]{0}', space=vmem, size = 0x2000, scoped, tag = 'input window, operand 0']
    #allocation5 [shape = 's32[2]{0}', space=sflag, size = 0x8, scoped, tag = 'scoped memory for tpu_custom_call.1']
    #allocation6 [shape = 's32[2]{0}', space=sflag, size = 0x8, scoped, tag = 'scoped memory for tpu_custom_call.1']
    #allocation7 [shape = 'u8[16384]{0}', space=vmem, size = 0x4000, scoped, tag = 'input window, operand 3, single buffered']
    #allocation8 [shape = 's32[1]{0}', space=sflag, size = 0x4, scoped, tag = 'scoped memory for tpu_custom_call.1']
    #allocation9 [shape = 'u8[16384]{0}', space=vmem, size = 0x4000, scoped, tag = 'input window, operand 4, single buffered']
    #allocation10 [shape = 'u8[8192]{0}', space=vmem, size = 0x2000, scoped, tag = 'output window, operand 0']
    %11 = vsyncpa [#allocation5], 0
    %s12 = scalar_lea.sflag [#allocation5], 1
    %13 = vsyncpa %s12, 0
    %14 = vsyncpa [#allocation8], 0
    %15 = vsyncpa [#allocation6], 0
    %s16 = scalar_lea.sflag [#allocation6], 1
    %17 = vsyncpa %s16, 0
    loop: start=0, step=1, limit=4
    $region2: #{tpu_custom_call.1} parent=1 // loop_pre_header
      _
    $region3: #{tpu_custom_call.1} parent=1 // loop_header
      %s19 = sphi 0, %s23
      %p20 = scmp.ge.s32.totalorder %s19, 4
      %s29 = sphi 0, %s31
      %s32 = sphi 0, %s29
      %s33 = sphi 0, %s32
      %s49 = sphi 0, %s33
      %s53 = sphi 0, %s53
      %s55 = sphi 0, %s53
      %s56 = sphi 0, %s55
      %s70 = sphi 0, %s56
      %s74 = sphi 0, %s74
      %s76 = sphi 0, %s74
      %s77 = sphi 0, %s76
      %s91 = sphi 0, %s77
      %s95 = sphi 0, %s95
      %s97 = sphi 0, %s95
      %s98 = sphi 0, %s97
      %s112 = sphi 0, %s98
      %s116 = sphi 0, %s116
      %s118 = sphi 0, %s116
      %s119 = sphi 0, %s118
      %s133 = sphi 0, %s119
      %s137 = sphi 0, %s137
      %s139 = sphi 0, %s137
      %s140 = sphi 0, %s139
      %s154 = sphi 0, %s140
      %s160 = sphi 0, %s162
      %s163 = sphi 0, %s160
      %s164 = sphi 0, %s163
      %s180 = sphi 0, %s164
    $region4: #{tpu_custom_call.1} parent=1 // loop_header_branch
      %22 = sbr.rel (%p20) target = $region8
    $region5: #{tpu_custom_call.1} parent=1 // loop_body
      %s24 = ssub.s32 %s19, 1
      %s25 = ssub.s32 %s19, 2
      %s26 = sadd.s32 %s19, 1
      %s27 = ssub.s32 %s19, %s26
      %p28 = scmp.eq.s32.totalorder %s27, 0
      %s30 = sadd.s32 %s29, 1
      %s31 = scalar_select %p28, %s29, %s30
      %p34 = pneg %p28
      %p35 = scmp.eq.s32.totalorder %s19, 1
      %p36 = por %p34, %p35
      %p37 = scmp.ne.s32.totalorder %s29, %s32
      %p38 = scmp.eq.s32.totalorder %s19, 0
      %p39 = por %p37, %p38
      %p40 = scmp.ne.s32.totalorder %s29, %s32
      %p41 = scmp.eq.s32.totalorder %s24, 1
      %p42 = por %p40, %p41
      %p43 = scmp.ne.s32.totalorder %s32, %s33
      %p44 = scmp.eq.s32.totalorder %s24, 0
      %p45 = por %p43, %p44
      %p46 = scmp.ne.s32.totalorder %s32, %s33
      %p47 = scmp.eq.s32.totalorder %s25, 1
      %p48 = por %p46, %p47
      %p50 = scmp.ne.s32.totalorder %s33, %s49
      %p51 = scmp.eq.s32.totalorder %s25, 0
      %p52 = por %p50, %p51
      %s54 = sadd.s32 %s53, 1
      %p57 = scmp.eq.s32.totalorder %s19, 1
      %p58 = scmp.ne.s32.totalorder %s53, %s55
      %p59 = scmp.eq.s32.totalorder %s19, 0
      %p60 = por %p58, %p59
      %p61 = scmp.ne.s32.totalorder %s53, %s55
      %p62 = scmp.eq.s32.totalorder %s24, 1
      %p63 = por %p61, %p62
      %p64 = scmp.ne.s32.totalorder %s55, %s56
      %p65 = scmp.eq.s32.totalorder %s24, 0
      %p66 = por %p64, %p65
      %p67 = scmp.ne.s32.totalorder %s55, %s56
      %p68 = scmp.eq.s32.totalorder %s25, 1
      %p69 = por %p67, %p68
      %p71 = scmp.ne.s32.totalorder %s56, %s70
      %p72 = scmp.eq.s32.totalorder %s25, 0
      %p73 = por %p71, %p72
      %s75 = sadd.s32 %s74, 1
      %p78 = scmp.eq.s32.totalorder %s19, 1
      %p79 = scmp.ne.s32.totalorder %s74, %s76
      %p80 = scmp.eq.s32.totalorder %s19, 0
      %p81 = por %p79, %p80
      %p82 = scmp.ne.s32.totalorder %s74, %s76
      %p83 = scmp.eq.s32.totalorder %s24, 1
      %p84 = por %p82, %p83
      %p85 = scmp.ne.s32.totalorder %s76, %s77
      %p86 = scmp.eq.s32.totalorder %s24, 0
      %p87 = por %p85, %p86
      %p88 = scmp.ne.s32.totalorder %s76, %s77
      %p89 = scmp.eq.s32.totalorder %s25, 1
      %p90 = por %p88, %p89
      %p92 = scmp.ne.s32.totalorder %s77, %s91
      %p93 = scmp.eq.s32.totalorder %s25, 0
      %p94 = por %p92, %p93
      %s96 = sadd.s32 %s95, 1
      %p99 = scmp.eq.s32.totalorder %s19, 1
      %p100 = scmp.ne.s32.totalorder %s95, %s97
      %p101 = scmp.eq.s32.totalorder %s19, 0
      %p102 = por %p100, %p101
      %p103 = scmp.ne.s32.totalorder %s95, %s97
      %p104 = scmp.eq.s32.totalorder %s24, 1
      %p105 = por %p103, %p104
      %p106 = scmp.ne.s32.totalorder %s97, %s98
      %p107 = scmp.eq.s32.totalorder %s24, 0
      %p108 = por %p106, %p107
      %p109 = scmp.ne.s32.totalorder %s97, %s98
      %p110 = scmp.eq.s32.totalorder %s25, 1
      %p111 = por %p109, %p110
      %p113 = scmp.ne.s32.totalorder %s98, %s112
      %p114 = scmp.eq.s32.totalorder %s25, 0
      %p115 = por %p113, %p114
      %s117 = sadd.s32 %s116, 1
      %p120 = scmp.eq.s32.totalorder %s19, 1
      %p121 = scmp.ne.s32.totalorder %s116, %s118
      %p122 = scmp.eq.s32.totalorder %s19, 0
      %p123 = por %p121, %p122
      %p124 = scmp.ne.s32.totalorder %s116, %s118
      %p125 = scmp.eq.s32.totalorder %s24, 1
      %p126 = por %p124, %p125
      %p127 = scmp.ne.s32.totalorder %s118, %s119
      %p128 = scmp.eq.s32.totalorder %s24, 0
      %p129 = por %p127, %p128
      %p130 = scmp.ne.s32.totalorder %s118, %s119
      %p131 = scmp.eq.s32.totalorder %s25, 1
      %p132 = por %p130, %p131
      %p134 = scmp.ne.s32.totalorder %s119, %s133
      %p135 = scmp.eq.s32.totalorder %s25, 0
      %p136 = por %p134, %p135
      %s138 = sadd.s32 %s137, 1
      %p141 = scmp.eq.s32.totalorder %s19, 1
      %p142 = scmp.ne.s32.totalorder %s137, %s139
      %p143 = scmp.eq.s32.totalorder %s19, 0
      %p144 = por %p142, %p143
      %p145 = scmp.ne.s32.totalorder %s137, %s139
      %p146 = scmp.eq.s32.totalorder %s24, 1
      %p147 = por %p145, %p146
      %p148 = scmp.ne.s32.totalorder %s139, %s140
      %p149 = scmp.eq.s32.totalorder %s24, 0
      %p150 = por %p148, %p149
      %p151 = scmp.ne.s32.totalorder %s139, %s140
      %p152 = scmp.eq.s32.totalorder %s25, 1
      %p153 = por %p151, %p152
      %p155 = scmp.ne.s32.totalorder %s140, %s154
      %p156 = scmp.eq.s32.totalorder %s25, 0
      %p157 = por %p155, %p156
      %s158 = ssub.s32 %s19, %s26
      %p159 = scmp.eq.s32.totalorder %s158, 0
      %s161 = sadd.s32 %s160, 1
      %s162 = scalar_select %p159, %s160, %s161
      %p165 = pneg %p159
      %p166 = scmp.eq.s32.totalorder %s19, 1
      %p167 = por %p165, %p166
      %p168 = scmp.ne.s32.totalorder %s160, %s163
      %p169 = scmp.eq.s32.totalorder %s19, 0
      %p170 = por %p168, %p169
      %p171 = scmp.ne.s32.totalorder %s160, %s163
      %p172 = scmp.eq.s32.totalorder %s24, 1
      %p173 = por %p171, %p172
      %p174 = scmp.ne.s32.totalorder %s163, %s164
      %p175 = scmp.eq.s32.totalorder %s24, 0
      %p176 = por %p174, %p175
      %p177 = scmp.ne.s32.totalorder %s163, %s164
      %p178 = scmp.eq.s32.totalorder %s25, 1
      %p179 = por %p177, %p178
      %p181 = scmp.ne.s32.totalorder %s164, %s180
      %p182 = scmp.eq.s32.totalorder %s25, 0
      %p183 = por %p181, %p182
      %p184 = scmp.le.s32.totalorder 1, %s19
      %p185 = scmp.lt.s32.totalorder %s19, 3
      %p186 = pnand %p184, %p185
      %p187 = pneg %p186
      // Predicated region
      $region9: #{tpu_custom_call.1} parent=5 // pred_check
        _
      $region10: #{tpu_custom_call.1} parent=5 // pred_check_branch
        %189 = sbr.rel (%p186) target = $region12
      $region11: #{tpu_custom_call.1} parent=5 // pred_region
        %s190 = ssub.s32 %s19, 1
        // Predicated region
        $region13: #{tpu_custom_call.1} parent=11 // pred_check
          %p191 = pneg %p66
        $region14: #{tpu_custom_call.1} parent=11 // pred_check_branch
          %193 = sbr.rel (%p191) target = $region16
        $region15: #{tpu_custom_call.1} parent=11 // pred_region
          _
        $region16: #{tpu_custom_call.1} parent=11 // pred_fallthru
          _
        // Predicated region
        $region17: #{tpu_custom_call.1} parent=11 // pred_check
          %p194 = pneg %p87
        $region18: #{tpu_custom_call.1} parent=11 // pred_check_branch
          %196 = sbr.rel (%p194) target = $region20
        $region19: #{tpu_custom_call.1} parent=11 // pred_region
          _
        $region20: #{tpu_custom_call.1} parent=11 // pred_fallthru
          _
        // Predicated region
        $region21: #{tpu_custom_call.1} parent=11 // pred_check
          %p197 = pneg %p108
        $region22: #{tpu_custom_call.1} parent=11 // pred_check_branch
          %199 = sbr.rel (%p197) target = $region24
        $region23: #{tpu_custom_call.1} parent=11 // pred_region
          %s201 = ssub.s32 512, 512
          %202 = vsyncadd [#allocation8], %s201
          %s203 = sshll.u32 [#allocation7], 4
          %s204 = int_to_ptr.vmem [resolvable:$true] %s203
          %209 = dma.hbm_to_vmem [thread:$0]  %s3, 512, %s204, [#allocation8], 128, 128, 8
        $region24: #{tpu_custom_call.1} parent=11 // pred_fallthru
          _
        // Predicated region
        $region25: #{tpu_custom_call.1} parent=11 // pred_check
          %p210 = pneg %p129
        $region26: #{tpu_custom_call.1} parent=11 // pred_check_branch
          %212 = sbr.rel (%p210) target = $region28
        $region27: #{tpu_custom_call.1} parent=11 // pred_region
          %s214 = ssub.s32 512, 512
          %215 = vsyncadd [#allocation8], %s214
          %s216 = sshll.u32 [#allocation9], 4
          %s217 = int_to_ptr.vmem [resolvable:$true] %s216
          %222 = dma.hbm_to_vmem [thread:$0]  %s4, 512, %s217, [#allocation8], 128, 128, 8
        $region28: #{tpu_custom_call.1} parent=11 // pred_fallthru
          _
        // Predicated region
        $region29: #{tpu_custom_call.1} parent=11 // pred_check
          %p223 = pneg %p150
        $region30: #{tpu_custom_call.1} parent=11 // pred_check_branch
          %225 = sbr.rel (%p223) target = $region32
        $region31: #{tpu_custom_call.1} parent=11 // pred_region
          _
        $region32: #{tpu_custom_call.1} parent=11 // pred_fallthru
          _
      $region12: #{tpu_custom_call.1} parent=5 // pred_fallthru
        _
      %p226 = scmp.lt.s32.totalorder %s19, 2
      // Predicated region
      $region33: #{tpu_custom_call.1} parent=5 // pred_check
        %p227 = pneg %p226
      $region34: #{tpu_custom_call.1} parent=5 // pred_check_branch
        %229 = sbr.rel (%p227) target = $region36
      $region35: #{tpu_custom_call.1} parent=5 // pred_region
        // Predicated region
        $region37: #{tpu_custom_call.1} parent=35 // pred_check
          %p230 = pneg %p39
        $region38: #{tpu_custom_call.1} parent=35 // pred_check_branch
          %232 = sbr.rel (%p230) target = $region40
        $region39: #{tpu_custom_call.1} parent=35 // pred_region
          %s233 = sand.u32 %s29, 1
          %s234 = scalar_lea.sflag [#allocation5], %s233
          %s235 = sand.u32 %s29, 1
          %s236 = smul.addr %s235, 8
          %s237 = scalar_lea.vmem [#allocation4], %s236
          %s239 = ssub.s32 128, 128
          %240 = vsyncadd %s234, %s239
          %s241 = smul.addr %s19, 128
          %s242 = scalar_lea.hbm %s0, %s241
          %s244 = sshll.u32 %s237, 4
          %s245 = int_to_ptr.vmem [resolvable:$true] %s244
          %247 = dma.hbm_to_vmem [thread:$0]  %s242, 128, %s245, %s234
        $region40: #{tpu_custom_call.1} parent=35 // pred_fallthru
          _
      $region36: #{tpu_custom_call.1} parent=5 // pred_fallthru
        _
      %p248 = scmp.le.s32.totalorder 1, %s19
      %p249 = scmp.lt.s32.totalorder %s19, 3
      %p250 = pnand %p248, %p249
      %p251 = pneg %p250
      // Predicated region
      $region41: #{tpu_custom_call.1} parent=5 // pred_check
        _
      $region42: #{tpu_custom_call.1} parent=5 // pred_check_branch
        %253 = sbr.rel (%p250) target = $region44
      $region43: #{tpu_custom_call.1} parent=5 // pred_region
        %s254 = ssub.s32 %s19, 1
        %s255 = sand.u32 %s32, 1
        %s256 = scalar_lea.sflag [#allocation5], %s255
        %s257 = sand.u32 %s32, 1
        %s258 = smul.addr %s257, 8
        %s259 = scalar_lea.vmem [#allocation4], %s258
        // Predicated region
        $region45: #{tpu_custom_call.1} parent=43 // pred_check
          %p260 = pneg %p45
        $region46: #{tpu_custom_call.1} parent=43 // pred_check_branch
          %262 = sbr.rel (%p260) target = $region48
        $region47: #{tpu_custom_call.1} parent=43 // pred_region
          %263 = dma.done %s256, 128
        $region48: #{tpu_custom_call.1} parent=43 // pred_fallthru
          _
        // Predicated region
        $region49: #{tpu_custom_call.1} parent=43 // pred_check
          %p264 = pneg %p108
        $region50: #{tpu_custom_call.1} parent=43 // pred_check_branch
          %266 = sbr.rel (%p264) target = $region52
        $region51: #{tpu_custom_call.1} parent=43 // pred_region
          %267 = dma.done [#allocation8], 512
        $region52: #{tpu_custom_call.1} parent=43 // pred_fallthru
          _
        // Predicated region
        $region53: #{tpu_custom_call.1} parent=43 // pred_check
          %p268 = pneg %p129
        $region54: #{tpu_custom_call.1} parent=43 // pred_check_branch
          %270 = sbr.rel (%p268) target = $region56
        $region55: #{tpu_custom_call.1} parent=43 // pred_region
          %271 = dma.done [#allocation8], 512
        $region56: #{tpu_custom_call.1} parent=43 // pred_fallthru
          _
        %s272 = sand.u32 %s32, 1
        %s273 = scalar_lea.sflag [#allocation5], %s272
        %s274 = sand.u32 %s32, 1
        %s275 = smul.addr %s274, 8
        %s276 = scalar_lea.vmem [#allocation4], %s275
        %p277 = pneg %p45
        %p278 = pneg %p42
        %p279 = pneg %p66
        %p280 = pneg %p63
        %p281 = pneg %p87
        %p282 = pneg %p84
        %p283 = pneg %p108
        %p284 = pneg %p105
        %p285 = pneg %p129
        %p286 = pneg %p126
        %p287 = pneg %p150
        %p288 = pneg %p147
        %p289 = pneg %p176
        %p290 = pneg %p173
        %s291 = sand.u32 %s163, 1
        %s292 = scalar_lea.sflag [#allocation6], %s291
        %s293 = sand.u32 %s163, 1
        %s294 = smul.addr %s293, 8
        %s295 = scalar_lea.vmem [#allocation10], %s294
        %v296 = vld [vmem:[%s259] sm:$0xff]
        %vm297 = vcmask 261120
        %v298 = vsel %vm297, %v296, 0.0
        %299 = vadd.xlane.f32.xlu0 %v298
        %v300 = vpop.xlane.xlu0 %299
        %v301 = vrcp.pop 32.0
        %v302 = vmul.f32 %v300, %v301
        %v303 = vsub.f32 %v296, %v302
        %v304 = vmul.f32 %v303, %v303
        %v305 = vsel %vm297, %v304, 0.0
        %306 = vadd.xlane.f32.xlu0 %v305
        %v307 = vpop.xlane.xlu0 %306
        %v308 = vmul.f32 %v307, %v301
        %v309 = vadd.f32 %v308, 1e-05
        %v310 = vrsqrt.pop %v309
        %v311 = vmul.f32 %v303, %v310
        %v312 = vld [vmem:[%s1] sm:$0x1]
        %v314 = vlaneseq
        %v315 = vshrl.u32 %v314, 7
        %v316 = vsub.s32 0, %v315
        %v317 = vrot.slane %v312, %v316
        %v319 = vmul.f32 %v311, %v317
        %v320 = vld [vmem:[%s2] sm:$0x1]
        %v322 = vlaneseq
        %v323 = vshrl.u32 %v322, 7
        %v324 = vsub.s32 0, %v323
        %v325 = vrot.slane %v320, %v324
        %v327 = vadd.f32 %v319, %v325
        %v328 = vld [vmem:[#allocation7] sm:$0xff]
        %v329 = vld [vmem:[#allocation7 + $0x8] sm:$0xff]
        %v330 = vld [vmem:[#allocation7 + $0x10] sm:$0xff]
        %v331 = vld [vmem:[#allocation7 + $0x18] sm:$0xff]
        %v333 = vsel %vm297, %v327, 0
        %335 = vmatprep.subr.mxu0 0.0
        %336 = vmatpush1.msra.mxu0 %v328
        %337 = vmatprep.subr.mxu0 0.0
        %338 = vmatpush1.msra.mxu0 %v329
        %339 = vmatprep.subr.mxu0 0.0
        %340 = vmatpush1.msra.mxu0 %v330
        %341 = vmatprep.subr.mxu0 0.0
        %342 = vmatpush1.msra.mxu0 %v331
        %343 = vmatprep.subr.mxu0 0.0
        %344 = vmatpush1.msra.mxu0 0.0
        %345 = vmatprep.subr.mxu0 0.0
        %346 = vmatpush1.msra.mxu0 0.0
        %347 = vmatprep.subr.mxu0 0.0
        %348 = vmatpush1.msra.mxu0 0.0
        %349 = vmatprep.subr.mxu0 0.0
        %350 = vmatpush1.msra.mxu0 0.0
        %351 = vmatprep.subr.mxu0 0.0
        %352 = vmatpush1.msra.mxu0 0.0
        %353 = vmatprep.subr.mxu0 0.0
        %354 = vmatpush1.msra.mxu0 0.0
        %355 = vmatprep.subr.mxu0 0.0
        %356 = vmatpush1.msra.mxu0 0.0
        %357 = vmatprep.subr.mxu0 0.0
        %358 = vmatpush1.msra.mxu0 0.0
        %359 = vmatprep.subr.mxu0 0.0
        %360 = vmatpush1.msra.mxu0 0.0
        %361 = vmatprep.subr.mxu0 0.0
        %362 = vmatpush1.msra.mxu0 0.0
        %363 = vmatprep.subr.mxu0 0.0
        %364 = vmatpush1.msra.mxu0 0.0
        %365 = vmatprep.subr.mxu0 0.0
        %366 = vmatpush1.msra.mxu0 0.0
        %367 = vmatprep.subr.mxu0 0.0
        %368 = vmatpush1.msra.mxu0 0.0
        %369 = vmatprep.subr.mxu0 0.0
        %370 = vmatpush1.msra.mxu0 0.0
        %371 = vmatprep.subr.mxu0 0.0
        %372 = vmatpush1.msra.mxu0 0.0
        %373 = vmatprep.subr.mxu0 0.0
        %374 = vmatpush1.msra.mxu0 0.0
        %375 = vmatprep.subr.mxu0 0.0
        %376 = vmatpush1.msra.mxu0 0.0
        %377 = vmatprep.subr.mxu0 0.0
        %378 = vmatpush1.msra.mxu0 0.0
        %379 = vmatprep.subr.mxu0 0.0
        %380 = vmatpush1.msra.mxu0 0.0
        %381 = vmatprep.subr.mxu0 0.0
        %382 = vmatpush1.msra.mxu0 0.0
        %383 = vmatprep.subr.mxu0 0.0
        %384 = vmatpush1.msra.mxu0 0.0
        %385 = vmatprep.subr.mxu0 0.0
        %386 = vmatpush1.msra.mxu0 0.0
        %387 = vmatprep.subr.mxu0 0.0
        %388 = vmatpush1.msra.mxu0 0.0
        %389 = vmatprep.subr.mxu0 0.0
        %390 = vmatpush1.msra.mxu0 0.0
        %391 = vmatprep.subr.mxu0 0.0
        %392 = vmatpush1.msra.mxu0 0.0
        %393 = vmatprep.subr.mxu0 0.0
        %394 = vmatpush1.msra.mxu0 0.0
        %395 = vmatprep.subr.mxu0 0.0
        %396 = vmatpush1.msra.mxu0 0.0
        %397 = vmatprep.subr.mxu0 0.0
        %398 = vmatpush1.msra.mxu0 0.0
        %399 = vmatprep.mubr.f32.mxu0 0.0
        %400 = vmatmul.mubr.f32.gmra.mrb[0].mxu0 %v333
        %v401 = vpop.f32.mrb[0].mxu0
        %v402 = vadd.f32 0.0, %v401
        %v403 = vpop.f32.mrb[0].mxu0
        %404 = vdwg.mxu0
        %v405 = vmul.f32 %v402, 0.35355338
        %406 = vst.msk [vmem:[#allocation2] sm:$0xff] %vm297, %v405
        %vm407 = vcmask 785664
        %408 = vst.msk [vmem:[#allocation2] sm:$0xff] %vm407, %v402
        %v409 = vld [vmem:[#allocation2] sm:$0xff]
        %411 = vrot.lane.b32.xlu0 %v409, 96
        %v412 = vpop.permute.xlu0 %411
        %vm413 = vcmask 64512
        %v414 = vsel %vm413, %v409, 0
        %v416 = vsel %vm413, %v412, 0
        %418 = vmatprep.subr.mxu0 0.0
        %419 = vmatpush1.xpose.msra.mxu0 %v416
        %420 = vmatprep.subr.mxu0 0.0
        %421 = vmatpush1.xpose.msra.mxu0 0.0
        %422 = vmatprep.subr.mxu0 0.0
        %423 = vmatpush1.xpose.msra.mxu0 0.0
        %424 = vmatprep.subr.mxu0 0.0
        %425 = vmatpush1.xpose.msra.mxu0 0.0
        %426 = vmatprep.subr.mxu0 0.0
        %427 = vmatpush1.xpose.msra.mxu0 0.0
        %428 = vmatprep.subr.mxu0 0.0
        %429 = vmatpush1.xpose.msra.mxu0 0.0
        %430 = vmatprep.subr.mxu0 0.0
        %431 = vmatpush1.xpose.msra.mxu0 0.0
        %432 = vmatprep.subr.mxu0 0.0
        %433 = vmatpush1.xpose.msra.mxu0 0.0
        %434 = vmatprep.subr.mxu0 0.0
        %435 = vmatpush1.xpose.msra.mxu0 0.0
        %436 = vmatprep.subr.mxu0 0.0
        %437 = vmatpush1.xpose.msra.mxu0 0.0
        %438 = vmatprep.subr.mxu0 0.0
        %439 = vmatpush1.xpose.msra.mxu0 0.0
        %440 = vmatprep.subr.mxu0 0.0
        %441 = vmatpush1.xpose.msra.mxu0 0.0
        %442 = vmatprep.subr.mxu0 0.0
        %443 = vmatpush1.xpose.msra.mxu0 0.0
        %444 = vmatprep.subr.mxu0 0.0
        %445 = vmatpush1.xpose.msra.mxu0 0.0
        %446 = vmatprep.subr.mxu0 0.0
        %447 = vmatpush1.xpose.msra.mxu0 0.0
        %448 = vmatprep.subr.mxu0 0.0
        %449 = vmatpush1.xpose.msra.mxu0 0.0
        %450 = vmatprep.subr.mxu0 0.0
        %451 = vmatpush1.xpose.msra.mxu0 0.0
        %452 = vmatprep.subr.mxu0 0.0
        %453 = vmatpush1.xpose.msra.mxu0 0.0
        %454 = vmatprep.subr.mxu0 0.0
        %455 = vmatpush1.xpose.msra.mxu0 0.0
        %456 = vmatprep.subr.mxu0 0.0
        %457 = vmatpush1.xpose.msra.mxu0 0.0
        %458 = vmatprep.subr.mxu0 0.0
        %459 = vmatpush1.xpose.msra.mxu0 0.0
        %460 = vmatprep.subr.mxu0 0.0
        %461 = vmatpush1.xpose.msra.mxu0 0.0
        %462 = vmatprep.subr.mxu0 0.0
        %463 = vmatpush1.xpose.msra.mxu0 0.0
        %464 = vmatprep.subr.mxu0 0.0
        %465 = vmatpush1.xpose.msra.mxu0 0.0
        %466 = vmatprep.subr.mxu0 0.0
        %467 = vmatpush1.xpose.msra.mxu0 0.0
        %468 = vmatprep.subr.mxu0 0.0
        %469 = vmatpush1.xpose.msra.mxu0 0.0
        %470 = vmatprep.subr.mxu0 0.0
        %471 = vmatpush1.xpose.msra.mxu0 0.0
        %472 = vmatprep.subr.mxu0 0.0
        %473 = vmatpush1.xpose.msra.mxu0 0.0
        %474 = vmatprep.subr.mxu0 0.0
        %475 = vmatpush1.xpose.msra.mxu0 0.0
        %476 = vmatprep.subr.mxu0 0.0
        %477 = vmatpush1.xpose.msra.mxu0 0.0
        %478 = vmatprep.subr.mxu0 0.0
        %479 = vmatpush1.xpose.msra.mxu0 0.0
        %480 = vmatprep.subr.mxu0 0.0
        %481 = vmatpush1.xpose.msra.mxu0 0.0
        %482 = vmatprep.mubr.f32.mxu0 0.0
        %483 = vmatmul.mubr.f32.gmra.mrb[0].mxu0 %v414
        %v484 = vpop.f32.mrb[0].mxu0
        %v485 = vadd.f32 0.0, %v484
        %v486 = vpop.f32.mrb[0].mxu0
        %487 = vdwg.mxu0
        %v488 = vsel %vm413, %v485, -inf
        %489 = vmax.xlane.f32.xlu0 %v488
        %v490 = vpop.xlane.xlu0 %489
        %v491 = vsub.f32 %v485, %v490
        %v492 = vmul.f32 %v491, 1.442695
        %v493 = vpow.pop %v492
        %v494 = vsel %vm413, %v493, 0.0
        %495 = vadd.xlane.f32.xlu0 %v494
        %v496 = vpop.xlane.xlu0 %495
        %v497 = vrcp.pop %v496
        %v498 = vmul.f32 %v496, %v497
        %v499 = vsub.f32 2.0, %v498
        %v500 = vmul.f32 %v497, %v499
        %v501 = vmul.f32 %v493, %v500
        %502 = vrot.lane.b32.xlu0 %v409, 64
        %v503 = vpop.permute.xlu0 %502
        %v506 = vsel %vm413, %v501, 0
        %508 = vmatprep.subr.mxu0 0.0
        %509 = vmatpush1.msra.mxu0 %v503
        %510 = vmatprep.subr.mxu0 0.0
        %511 = vmatpush1.msra.mxu0 0.0
        %512 = vmatprep.subr.mxu0 0.0
        %513 = vmatpush1.msra.mxu0 0.0
        %514 = vmatprep.subr.mxu0 0.0
        %515 = vmatpush1.msra.mxu0 0.0
        %516 = vmatprep.subr.mxu0 0.0
        %517 = vmatpush1.msra.mxu0 0.0
        %518 = vmatprep.subr.mxu0 0.0
        %519 = vmatpush1.msra.mxu0 0.0
        %520 = vmatprep.subr.mxu0 0.0
        %521 = vmatpush1.msra.mxu0 0.0
        %522 = vmatprep.subr.mxu0 0.0
        %523 = vmatpush1.msra.mxu0 0.0
        %524 = vmatprep.subr.mxu0 0.0
        %525 = vmatpush1.msra.mxu0 0.0
        %526 = vmatprep.subr.mxu0 0.0
        %527 = vmatpush1.msra.mxu0 0.0
        %528 = vmatprep.subr.mxu0 0.0
        %529 = vmatpush1.msra.mxu0 0.0
        %530 = vmatprep.subr.mxu0 0.0
        %531 = vmatpush1.msra.mxu0 0.0
        %532 = vmatprep.subr.mxu0 0.0
        %533 = vmatpush1.msra.mxu0 0.0
        %534 = vmatprep.subr.mxu0 0.0
        %535 = vmatpush1.msra.mxu0 0.0
        %536 = vmatprep.subr.mxu0 0.0
        %537 = vmatpush1.msra.mxu0 0.0
        %538 = vmatprep.subr.mxu0 0.0
        %539 = vmatpush1.msra.mxu0 0.0
        %540 = vmatprep.subr.mxu0 0.0
        %541 = vmatpush1.msra.mxu0 0.0
        %542 = vmatprep.subr.mxu0 0.0
        %543 = vmatpush1.msra.mxu0 0.0
        %544 = vmatprep.subr.mxu0 0.0
        %545 = vmatpush1.msra.mxu0 0.0
        %546 = vmatprep.subr.mxu0 0.0
        %547 = vmatpush1.msra.mxu0 0.0
        %548 = vmatprep.subr.mxu0 0.0
        %549 = vmatpush1.msra.mxu0 0.0
        %550 = vmatprep.subr.mxu0 0.0
        %551 = vmatpush1.msra.mxu0 0.0
        %552 = vmatprep.subr.mxu0 0.0
        %553 = vmatpush1.msra.mxu0 0.0
        %554 = vmatprep.subr.mxu0 0.0
        %555 = vmatpush1.msra.mxu0 0.0
        %556 = vmatprep.subr.mxu0 0.0
        %557 = vmatpush1.msra.mxu0 0.0
        %558 = vmatprep.subr.mxu0 0.0
        %559 = vmatpush1.msra.mxu0 0.0
        %560 = vmatprep.subr.mxu0 0.0
        %561 = vmatpush1.msra.mxu0 0.0
        %562 = vmatprep.subr.mxu0 0.0
        %563 = vmatpush1.msra.mxu0 0.0
        %564 = vmatprep.subr.mxu0 0.0
        %565 = vmatpush1.msra.mxu0 0.0
        %566 = vmatprep.subr.mxu0 0.0
        %567 = vmatpush1.msra.mxu0 0.0
        %568 = vmatprep.subr.mxu0 0.0
        %569 = vmatpush1.msra.mxu0 0.0
        %570 = vmatprep.subr.mxu0 0.0
        %571 = vmatpush1.msra.mxu0 0.0
        %572 = vmatprep.mubr.f32.mxu0 0.0
        %573 = vmatmul.mubr.f32.gmra.mrb[0].mxu0 %v506
        %v574 = vpop.f32.mrb[0].mxu0
        %v575 = vadd.f32 0.0, %v574
        %v576 = vpop.f32.mrb[0].mxu0
        %577 = vdwg.mxu0
        %578 = vst.msk [vmem:[#allocation3] sm:$0xff] %vm413, %v575
        %v579 = vld [vmem:[#allocation2] sm:$0xff]
        %581 = vrot.lane.b32.xlu0 %v579, 120
        %v582 = vpop.permute.xlu0 %581
        %583 = vrot.lane.b32.xlu0 %v579, 88
        %v584 = vpop.permute.xlu0 %583
        %v585 = vsel %vm413, %v582, 0
        %v587 = vsel %vm413, %v584, 0
        %589 = vmatprep.subr.mxu0 0.0
        %590 = vmatpush1.xpose.msra.mxu0 %v587
        %591 = vmatprep.subr.mxu0 0.0
        %592 = vmatpush1.xpose.msra.mxu0 0.0
        %593 = vmatprep.subr.mxu0 0.0
        %594 = vmatpush1.xpose.msra.mxu0 0.0
        %595 = vmatprep.subr.mxu0 0.0
        %596 = vmatpush1.xpose.msra.mxu0 0.0
        %597 = vmatprep.subr.mxu0 0.0
        %598 = vmatpush1.xpose.msra.mxu0 0.0
        %599 = vmatprep.subr.mxu0 0.0
        %600 = vmatpush1.xpose.msra.mxu0 0.0
        %601 = vmatprep.subr.mxu0 0.0
        %602 = vmatpush1.xpose.msra.mxu0 0.0
        %603 = vmatprep.subr.mxu0 0.0
        %604 = vmatpush1.xpose.msra.mxu0 0.0
        %605 = vmatprep.subr.mxu0 0.0
        %606 = vmatpush1.xpose.msra.mxu0 0.0
        %607 = vmatprep.subr.mxu0 0.0
        %608 = vmatpush1.xpose.msra.mxu0 0.0
        %609 = vmatprep.subr.mxu0 0.0
        %610 = vmatpush1.xpose.msra.mxu0 0.0
        %611 = vmatprep.subr.mxu0 0.0
        %612 = vmatpush1.xpose.msra.mxu0 0.0
        %613 = vmatprep.subr.mxu0 0.0
        %614 = vmatpush1.xpose.msra.mxu0 0.0
        %615 = vmatprep.subr.mxu0 0.0
        %616 = vmatpush1.xpose.msra.mxu0 0.0
        %617 = vmatprep.subr.mxu0 0.0
        %618 = vmatpush1.xpose.msra.mxu0 0.0
        %619 = vmatprep.subr.mxu0 0.0
        %620 = vmatpush1.xpose.msra.mxu0 0.0
        %621 = vmatprep.subr.mxu0 0.0
        %622 = vmatpush1.xpose.msra.mxu0 0.0
        %623 = vmatprep.subr.mxu0 0.0
        %624 = vmatpush1.xpose.msra.mxu0 0.0
        %625 = vmatprep.subr.mxu0 0.0
        %626 = vmatpush1.xpose.msra.mxu0 0.0
        %627 = vmatprep.subr.mxu0 0.0
        %628 = vmatpush1.xpose.msra.mxu0 0.0
        %629 = vmatprep.subr.mxu0 0.0
        %630 = vmatpush1.xpose.msra.mxu0 0.0
        %631 = vmatprep.subr.mxu0 0.0
        %632 = vmatpush1.xpose.msra.mxu0 0.0
        %633 = vmatprep.subr.mxu0 0.0
        %634 = vmatpush1.xpose.msra.mxu0 0.0
        %635 = vmatprep.subr.mxu0 0.0
        %636 = vmatpush1.xpose.msra.mxu0 0.0
        %637 = vmatprep.subr.mxu0 0.0
        %638 = vmatpush1.xpose.msra.mxu0 0.0
        %639 = vmatprep.subr.mxu0 0.0
        %640 = vmatpush1.xpose.msra.mxu0 0.0
        %641 = vmatprep.subr.mxu0 0.0
        %642 = vmatpush1.xpose.msra.mxu0 0.0
        %643 = vmatprep.subr.mxu0 0.0
        %644 = vmatpush1.xpose.msra.mxu0 0.0
        %645 = vmatprep.subr.mxu0 0.0
        %646 = vmatpush1.xpose.msra.mxu0 0.0
        %647 = vmatprep.subr.mxu0 0.0
        %648 = vmatpush1.xpose.msra.mxu0 0.0
        %649 = vmatprep.subr.mxu0 0.0
        %650 = vmatpush1.xpose.msra.mxu0 0.0
        %651 = vmatprep.subr.mxu0 0.0
        %652 = vmatpush1.xpose.msra.mxu0 0.0
        %653 = vmatprep.mubr.f32.mxu0 0.0
        %654 = vmatmul.mubr.f32.gmra.mrb[0].mxu0 %v585
        %v655 = vpop.f32.mrb[0].mxu0
        %v656 = vadd.f32 0.0, %v655
        %v657 = vpop.f32.mrb[0].mxu0
        %658 = vdwg.mxu0
        %v659 = vsel %vm413, %v656, -inf
        %660 = vmax.xlane.f32.xlu0 %v659
        %v661 = vpop.xlane.xlu0 %660
        %v662 = vsub.f32 %v656, %v661
        %v663 = vmul.f32 %v662, 1.442695
        %v664 = vpow.pop %v663
        %v665 = vsel %vm413, %v664, 0.0
        %666 = vadd.xlane.f32.xlu0 %v665
        %v667 = vpop.xlane.xlu0 %666
        %v668 = vrcp.pop %v667
        %v669 = vmul.f32 %v667, %v668
        %v670 = vsub.f32 2.0, %v669
        %v671 = vmul.f32 %v668, %v670
        %v672 = vmul.f32 %v664, %v671
        %673 = vrot.lane.b32.xlu0 %v579, 56
        %v674 = vpop.permute.xlu0 %673
        %v677 = vsel %vm413, %v672, 0
        %679 = vmatprep.subr.mxu0 0.0
        %680 = vmatpush1.msra.mxu0 %v674
        %681 = vmatprep.subr.mxu0 0.0
        %682 = vmatpush1.msra.mxu0 0.0
        %683 = vmatprep.subr.mxu0 0.0
        %684 = vmatpush1.msra.mxu0 0.0
        %685 = vmatprep.subr.mxu0 0.0
        %686 = vmatpush1.msra.mxu0 0.0
        %687 = vmatprep.subr.mxu0 0.0
        %688 = vmatpush1.msra.mxu0 0.0
        %689 = vmatprep.subr.mxu0 0.0
        %690 = vmatpush1.msra.mxu0 0.0
        %691 = vmatprep.subr.mxu0 0.0
        %692 = vmatpush1.msra.mxu0 0.0
        %693 = vmatprep.subr.mxu0 0.0
        %694 = vmatpush1.msra.mxu0 0.0
        %695 = vmatprep.subr.mxu0 0.0
        %696 = vmatpush1.msra.mxu0 0.0
        %697 = vmatprep.subr.mxu0 0.0
        %698 = vmatpush1.msra.mxu0 0.0
        %699 = vmatprep.subr.mxu0 0.0
        %700 = vmatpush1.msra.mxu0 0.0
        %701 = vmatprep.subr.mxu0 0.0
        %702 = vmatpush1.msra.mxu0 0.0
        %703 = vmatprep.subr.mxu0 0.0
        %704 = vmatpush1.msra.mxu0 0.0
        %705 = vmatprep.subr.mxu0 0.0
        %706 = vmatpush1.msra.mxu0 0.0
        %707 = vmatprep.subr.mxu0 0.0
        %708 = vmatpush1.msra.mxu0 0.0
        %709 = vmatprep.subr.mxu0 0.0
        %710 = vmatpush1.msra.mxu0 0.0
        %711 = vmatprep.subr.mxu0 0.0
        %712 = vmatpush1.msra.mxu0 0.0
        %713 = vmatprep.subr.mxu0 0.0
        %714 = vmatpush1.msra.mxu0 0.0
        %715 = vmatprep.subr.mxu0 0.0
        %716 = vmatpush1.msra.mxu0 0.0
        %717 = vmatprep.subr.mxu0 0.0
        %718 = vmatpush1.msra.mxu0 0.0
        %719 = vmatprep.subr.mxu0 0.0
        %720 = vmatpush1.msra.mxu0 0.0
        %721 = vmatprep.subr.mxu0 0.0
        %722 = vmatpush1.msra.mxu0 0.0
        %723 = vmatprep.subr.mxu0 0.0
        %724 = vmatpush1.msra.mxu0 0.0
        %725 = vmatprep.subr.mxu0 0.0
        %726 = vmatpush1.msra.mxu0 0.0
        %727 = vmatprep.subr.mxu0 0.0
        %728 = vmatpush1.msra.mxu0 0.0
        %729 = vmatprep.subr.mxu0 0.0
        %730 = vmatpush1.msra.mxu0 0.0
        %731 = vmatprep.subr.mxu0 0.0
        %732 = vmatpush1.msra.mxu0 0.0
        %733 = vmatprep.subr.mxu0 0.0
        %734 = vmatpush1.msra.mxu0 0.0
        %735 = vmatprep.subr.mxu0 0.0
        %736 = vmatpush1.msra.mxu0 0.0
        %737 = vmatprep.subr.mxu0 0.0
        %738 = vmatpush1.msra.mxu0 0.0
        %739 = vmatprep.subr.mxu0 0.0
        %740 = vmatpush1.msra.mxu0 0.0
        %741 = vmatprep.subr.mxu0 0.0
        %742 = vmatpush1.msra.mxu0 0.0
        %743 = vmatprep.mubr.f32.mxu0 0.0
        %744 = vmatmul.mubr.f32.gmra.mrb[0].mxu0 %v677
        %v745 = vpop.f32.mrb[0].mxu0
        %v746 = vadd.f32 0.0, %v745
        %v747 = vpop.f32.mrb[0].mxu0
        %748 = vdwg.mxu0
        %750 = vrot.lane.b32.xlu0 %v746, 8
        %v751 = vpop.permute.xlu0 %750
        %vm753 = vcmask 130112
        %754 = vst.msk [vmem:[#allocation3] sm:$0xff] %vm753, %v751
        %v755 = vld [vmem:[#allocation2] sm:$0xff]
        %757 = vrot.lane.b32.xlu0 %v755, 112
        %v758 = vpop.permute.xlu0 %757
        %759 = vrot.lane.b32.xlu0 %v755, 80
        %v760 = vpop.permute.xlu0 %759
        %v761 = vsel %vm413, %v758, 0
        %v763 = vsel %vm413, %v760, 0
        %765 = vmatprep.subr.mxu0 0.0
        %766 = vmatpush1.xpose.msra.mxu0 %v763
        %767 = vmatprep.subr.mxu0 0.0
        %768 = vmatpush1.xpose.msra.mxu0 0.0
        %769 = vmatprep.subr.mxu0 0.0
        %770 = vmatpush1.xpose.msra.mxu0 0.0
        %771 = vmatprep.subr.mxu0 0.0
        %772 = vmatpush1.xpose.msra.mxu0 0.0
        %773 = vmatprep.subr.mxu0 0.0
        %774 = vmatpush1.xpose.msra.mxu0 0.0
        %775 = vmatprep.subr.mxu0 0.0
        %776 = vmatpush1.xpose.msra.mxu0 0.0
        %777 = vmatprep.subr.mxu0 0.0
        %778 = vmatpush1.xpose.msra.mxu0 0.0
        %779 = vmatprep.subr.mxu0 0.0
        %780 = vmatpush1.xpose.msra.mxu0 0.0
        %781 = vmatprep.subr.mxu0 0.0
        %782 = vmatpush1.xpose.msra.mxu0 0.0
        %783 = vmatprep.subr.mxu0 0.0
        %784 = vmatpush1.xpose.msra.mxu0 0.0
        %785 = vmatprep.subr.mxu0 0.0
        %786 = vmatpush1.xpose.msra.mxu0 0.0
        %787 = vmatprep.subr.mxu0 0.0
        %788 = vmatpush1.xpose.msra.mxu0 0.0
        %789 = vmatprep.subr.mxu0 0.0
        %790 = vmatpush1.xpose.msra.mxu0 0.0
        %791 = vmatprep.subr.mxu0 0.0
        %792 = vmatpush1.xpose.msra.mxu0 0.0
        %793 = vmatprep.subr.mxu0 0.0
        %794 = vmatpush1.xpose.msra.mxu0 0.0
        %795 = vmatprep.subr.mxu0 0.0
        %796 = vmatpush1.xpose.msra.mxu0 0.0
        %797 = vmatprep.subr.mxu0 0.0
        %798 = vmatpush1.xpose.msra.mxu0 0.0
        %799 = vmatprep.subr.mxu0 0.0
        %800 = vmatpush1.xpose.msra.mxu0 0.0
        %801 = vmatprep.subr.mxu0 0.0
        %802 = vmatpush1.xpose.msra.mxu0 0.0
        %803 = vmatprep.subr.mxu0 0.0
        %804 = vmatpush1.xpose.msra.mxu0 0.0
        %805 = vmatprep.subr.mxu0 0.0
        %806 = vmatpush1.xpose.msra.mxu0 0.0
        %807 = vmatprep.subr.mxu0 0.0
        %808 = vmatpush1.xpose.msra.mxu0 0.0
        %809 = vmatprep.subr.mxu0 0.0
        %810 = vmatpush1.xpose.msra.mxu0 0.0
        %811 = vmatprep.subr.mxu0 0.0
        %812 = vmatpush1.xpose.msra.mxu0 0.0
        %813 = vmatprep.subr.mxu0 0.0
        %814 = vmatpush1.xpose.msra.mxu0 0.0
        %815 = vmatprep.subr.mxu0 0.0
        %816 = vmatpush1.xpose.msra.mxu0 0.0
        %817 = vmatprep.subr.mxu0 0.0
        %818 = vmatpush1.xpose.msra.mxu0 0.0
        %819 = vmatprep.subr.mxu0 0.0
        %820 = vmatpush1.xpose.msra.mxu0 0.0
        %821 = vmatprep.subr.mxu0 0.0
        %822 = vmatpush1.xpose.msra.mxu0 0.0
        %823 = vmatprep.subr.mxu0 0.0
        %824 = vmatpush1.xpose.msra.mxu0 0.0
        %825 = vmatprep.subr.mxu0 0.0
        %826 = vmatpush1.xpose.msra.mxu0 0.0
        %827 = vmatprep.subr.mxu0 0.0
        %828 = vmatpush1.xpose.msra.mxu0 0.0
        %829 = vmatprep.mubr.f32.mxu0 0.0
        %830 = vmatmul.mubr.f32.gmra.mrb[0].mxu0 %v761
        %v831 = vpop.f32.mrb[0].mxu0
        %v832 = vadd.f32 0.0, %v831
        %v833 = vpop.f32.mrb[0].mxu0
        %834 = vdwg.mxu0
        %v835 = vsel %vm413, %v832, -inf
        %836 = vmax.xlane.f32.xlu0 %v835
        %v837 = vpop.xlane.xlu0 %836
        %v838 = vsub.f32 %v832, %v837
        %v839 = vmul.f32 %v838, 1.442695
        %v840 = vpow.pop %v839
        %v841 = vsel %vm413, %v840, 0.0
        %842 = vadd.xlane.f32.xlu0 %v841
        %v843 = vpop.xlane.xlu0 %842
        %v844 = vrcp.pop %v843
        %v845 = vmul.f32 %v843, %v844
        %v846 = vsub.f32 2.0, %v845
        %v847 = vmul.f32 %v844, %v846
        %v848 = vmul.f32 %v840, %v847
        %849 = vrot.lane.b32.xlu0 %v755, 48
        %v850 = vpop.permute.xlu0 %849
        %v853 = vsel %vm413, %v848, 0
        %855 = vmatprep.subr.mxu0 0.0
        %856 = vmatpush1.msra.mxu0 %v850
        %857 = vmatprep.subr.mxu0 0.0
        %858 = vmatpush1.msra.mxu0 0.0
        %859 = vmatprep.subr.mxu0 0.0
        %860 = vmatpush1.msra.mxu0 0.0
        %861 = vmatprep.subr.mxu0 0.0
        %862 = vmatpush1.msra.mxu0 0.0
        %863 = vmatprep.subr.mxu0 0.0
        %864 = vmatpush1.msra.mxu0 0.0
        %865 = vmatprep.subr.mxu0 0.0
        %866 = vmatpush1.msra.mxu0 0.0
        %867 = vmatprep.subr.mxu0 0.0
        %868 = vmatpush1.msra.mxu0 0.0
        %869 = vmatprep.subr.mxu0 0.0
        %870 = vmatpush1.msra.mxu0 0.0
        %871 = vmatprep.subr.mxu0 0.0
        %872 = vmatpush1.msra.mxu0 0.0
        %873 = vmatprep.subr.mxu0 0.0
        %874 = vmatpush1.msra.mxu0 0.0
        %875 = vmatprep.subr.mxu0 0.0
        %876 = vmatpush1.msra.mxu0 0.0
        %877 = vmatprep.subr.mxu0 0.0
        %878 = vmatpush1.msra.mxu0 0.0
        %879 = vmatprep.subr.mxu0 0.0
        %880 = vmatpush1.msra.mxu0 0.0
        %881 = vmatprep.subr.mxu0 0.0
        %882 = vmatpush1.msra.mxu0 0.0
        %883 = vmatprep.subr.mxu0 0.0
        %884 = vmatpush1.msra.mxu0 0.0
        %885 = vmatprep.subr.mxu0 0.0
        %886 = vmatpush1.msra.mxu0 0.0
        %887 = vmatprep.subr.mxu0 0.0
        %888 = vmatpush1.msra.mxu0 0.0
        %889 = vmatprep.subr.mxu0 0.0
        %890 = vmatpush1.msra.mxu0 0.0
        %891 = vmatprep.subr.mxu0 0.0
        %892 = vmatpush1.msra.mxu0 0.0
        %893 = vmatprep.subr.mxu0 0.0
        %894 = vmatpush1.msra.mxu0 0.0
        %895 = vmatprep.subr.mxu0 0.0
        %896 = vmatpush1.msra.mxu0 0.0
        %897 = vmatprep.subr.mxu0 0.0
        %898 = vmatpush1.msra.mxu0 0.0
        %899 = vmatprep.subr.mxu0 0.0
        %900 = vmatpush1.msra.mxu0 0.0
        %901 = vmatprep.subr.mxu0 0.0
        %902 = vmatpush1.msra.mxu0 0.0
        %903 = vmatprep.subr.mxu0 0.0
        %904 = vmatpush1.msra.mxu0 0.0
        %905 = vmatprep.subr.mxu0 0.0
        %906 = vmatpush1.msra.mxu0 0.0
        %907 = vmatprep.subr.mxu0 0.0
        %908 = vmatpush1.msra.mxu0 0.0
        %909 = vmatprep.subr.mxu0 0.0
        %910 = vmatpush1.msra.mxu0 0.0
        %911 = vmatprep.subr.mxu0 0.0
        %912 = vmatpush1.msra.mxu0 0.0
        %913 = vmatprep.subr.mxu0 0.0
        %914 = vmatpush1.msra.mxu0 0.0
        %915 = vmatprep.subr.mxu0 0.0
        %916 = vmatpush1.msra.mxu0 0.0
        %917 = vmatprep.subr.mxu0 0.0
        %918 = vmatpush1.msra.mxu0 0.0
        %919 = vmatprep.mubr.f32.mxu0 0.0
        %920 = vmatmul.mubr.f32.gmra.mrb[0].mxu0 %v853
        %v921 = vpop.f32.mrb[0].mxu0
        %v922 = vadd.f32 0.0, %v921
        %v923 = vpop.f32.mrb[0].mxu0
        %924 = vdwg.mxu0
        %926 = vrot.lane.b32.xlu0 %v922, 16
        %v927 = vpop.permute.xlu0 %926
        %vm929 = vcmask 195712
        %930 = vst.msk [vmem:[#allocation3] sm:$0xff] %vm929, %v927
        %v931 = vld [vmem:[#allocation2] sm:$0xff]
        %933 = vrot.lane.b32.xlu0 %v931, 104
        %v934 = vpop.permute.xlu0 %933
        %935 = vrot.lane.b32.xlu0 %v931, 72
        %v936 = vpop.permute.xlu0 %935
        %v937 = vsel %vm413, %v934, 0
        %v939 = vsel %vm413, %v936, 0
        %941 = vmatprep.subr.mxu0 0.0
        %942 = vmatpush1.xpose.msra.mxu0 %v939
        %943 = vmatprep.subr.mxu0 0.0
        %944 = vmatpush1.xpose.msra.mxu0 0.0
        %945 = vmatprep.subr.mxu0 0.0
        %946 = vmatpush1.xpose.msra.mxu0 0.0
        %947 = vmatprep.subr.mxu0 0.0
        %948 = vmatpush1.xpose.msra.mxu0 0.0
        %949 = vmatprep.subr.mxu0 0.0
        %950 = vmatpush1.xpose.msra.mxu0 0.0
        %951 = vmatprep.subr.mxu0 0.0
        %952 = vmatpush1.xpose.msra.mxu0 0.0
        %953 = vmatprep.subr.mxu0 0.0
        %954 = vmatpush1.xpose.msra.mxu0 0.0
        %955 = vmatprep.subr.mxu0 0.0
        %956 = vmatpush1.xpose.msra.mxu0 0.0
        %957 = vmatprep.subr.mxu0 0.0
        %958 = vmatpush1.xpose.msra.mxu0 0.0
        %959 = vmatprep.subr.mxu0 0.0
        %960 = vmatpush1.xpose.msra.mxu0 0.0
        %961 = vmatprep.subr.mxu0 0.0
        %962 = vmatpush1.xpose.msra.mxu0 0.0
        %963 = vmatprep.subr.mxu0 0.0
        %964 = vmatpush1.xpose.msra.mxu0 0.0
        %965 = vmatprep.subr.mxu0 0.0
        %966 = vmatpush1.xpose.msra.mxu0 0.0
        %967 = vmatprep.subr.mxu0 0.0
        %968 = vmatpush1.xpose.msra.mxu0 0.0
        %969 = vmatprep.subr.mxu0 0.0
        %970 = vmatpush1.xpose.msra.mxu0 0.0
        %971 = vmatprep.subr.mxu0 0.0
        %972 = vmatpush1.xpose.msra.mxu0 0.0
        %973 = vmatprep.subr.mxu0 0.0
        %974 = vmatpush1.xpose.msra.mxu0 0.0
        %975 = vmatprep.subr.mxu0 0.0
        %976 = vmatpush1.xpose.msra.mxu0 0.0
        %977 = vmatprep.subr.mxu0 0.0
        %978 = vmatpush1.xpose.msra.mxu0 0.0
        %979 = vmatprep.subr.mxu0 0.0
        %980 = vmatpush1.xpose.msra.mxu0 0.0
        %981 = vmatprep.subr.mxu0 0.0
        %982 = vmatpush1.xpose.msra.mxu0 0.0
        %983 = vmatprep.subr.mxu0 0.0
        %984 = vmatpush1.xpose.msra.mxu0 0.0
        %985 = vmatprep.subr.mxu0 0.0
        %986 = vmatpush1.xpose.msra.mxu0 0.0
        %987 = vmatprep.subr.mxu0 0.0
        %988 = vmatpush1.xpose.msra.mxu0 0.0
        %989 = vmatprep.subr.mxu0 0.0
        %990 = vmatpush1.xpose.msra.mxu0 0.0
        %991 = vmatprep.subr.mxu0 0.0
        %992 = vmatpush1.xpose.msra.mxu0 0.0
        %993 = vmatprep.subr.mxu0 0.0
        %994 = vmatpush1.xpose.msra.mxu0 0.0
        %995 = vmatprep.subr.mxu0 0.0
        %996 = vmatpush1.xpose.msra.mxu0 0.0
        %997 = vmatprep.subr.mxu0 0.0
        %998 = vmatpush1.xpose.msra.mxu0 0.0
        %999 = vmatprep.subr.mxu0 0.0
        %1000 = vmatpush1.xpose.msra.mxu0 0.0
        %1001 = vmatprep.subr.mxu0 0.0
        %1002 = vmatpush1.xpose.msra.mxu0 0.0
        %1003 = vmatprep.subr.mxu0 0.0
        %1004 = vmatpush1.xpose.msra.mxu0 0.0
        %1005 = vmatprep.mubr.f32.mxu0 0.0
        %1006 = vmatmul.mubr.f32.gmra.mrb[0].mxu0 %v937
        %v1007 = vpop.f32.mrb[0].mxu0
        %v1008 = vadd.f32 0.0, %v1007
        %v1009 = vpop.f32.mrb[0].mxu0
        %1010 = vdwg.mxu0
        %v1011 = vsel %vm413, %v1008, -inf
        %1012 = vmax.xlane.f32.xlu0 %v1011
        %v1013 = vpop.xlane.xlu0 %1012
        %v1014 = vsub.f32 %v1008, %v1013
        %v1015 = vmul.f32 %v1014, 1.442695
        %v1016 = vpow.pop %v1015
        %v1017 = vsel %vm413, %v1016, 0.0
        %1018 = vadd.xlane.f32.xlu0 %v1017
        %v1019 = vpop.xlane.xlu0 %1018
        %v1020 = vrcp.pop %v1019
        %v1021 = vmul.f32 %v1019, %v1020
        %v1022 = vsub.f32 2.0, %v1021
        %v1023 = vmul.f32 %v1020, %v1022
        %v1024 = vmul.f32 %v1016, %v1023
        %1025 = vrot.lane.b32.xlu0 %v931, 40
        %v1026 = vpop.permute.xlu0 %1025
        %v1029 = vsel %vm413, %v1024, 0
        %1031 = vmatprep.subr.mxu0 0.0
        %1032 = vmatpush1.msra.mxu0 %v1026
        %1033 = vmatprep.subr.mxu0 0.0
        %1034 = vmatpush1.msra.mxu0 0.0
        %1035 = vmatprep.subr.mxu0 0.0
        %1036 = vmatpush1.msra.mxu0 0.0
        %1037 = vmatprep.subr.mxu0 0.0
        %1038 = vmatpush1.msra.mxu0 0.0
        %1039 = vmatprep.subr.mxu0 0.0
        %1040 = vmatpush1.msra.mxu0 0.0
        %1041 = vmatprep.subr.mxu0 0.0
        %1042 = vmatpush1.msra.mxu0 0.0
        %1043 = vmatprep.subr.mxu0 0.0
        %1044 = vmatpush1.msra.mxu0 0.0
        %1045 = vmatprep.subr.mxu0 0.0
        %1046 = vmatpush1.msra.mxu0 0.0
        %1047 = vmatprep.subr.mxu0 0.0
        %1048 = vmatpush1.msra.mxu0 0.0
        %1049 = vmatprep.subr.mxu0 0.0
        %1050 = vmatpush1.msra.mxu0 0.0
        %1051 = vmatprep.subr.mxu0 0.0
        %1052 = vmatpush1.msra.mxu0 0.0
        %1053 = vmatprep.subr.mxu0 0.0
        %1054 = vmatpush1.msra.mxu0 0.0
        %1055 = vmatprep.subr.mxu0 0.0
        %1056 = vmatpush1.msra.mxu0 0.0
        %1057 = vmatprep.subr.mxu0 0.0
        %1058 = vmatpush1.msra.mxu0 0.0
        %1059 = vmatprep.subr.mxu0 0.0
        %1060 = vmatpush1.msra.mxu0 0.0
        %1061 = vmatprep.subr.mxu0 0.0
        %1062 = vmatpush1.msra.mxu0 0.0
        %1063 = vmatprep.subr.mxu0 0.0
        %1064 = vmatpush1.msra.mxu0 0.0
        %1065 = vmatprep.subr.mxu0 0.0
        %1066 = vmatpush1.msra.mxu0 0.0
        %1067 = vmatprep.subr.mxu0 0.0
        %1068 = vmatpush1.msra.mxu0 0.0
        %1069 = vmatprep.subr.mxu0 0.0
        %1070 = vmatpush1.msra.mxu0 0.0
        %1071 = vmatprep.subr.mxu0 0.0
        %1072 = vmatpush1.msra.mxu0 0.0
        %1073 = vmatprep.subr.mxu0 0.0
        %1074 = vmatpush1.msra.mxu0 0.0
        %1075 = vmatprep.subr.mxu0 0.0
        %1076 = vmatpush1.msra.mxu0 0.0
        %1077 = vmatprep.subr.mxu0 0.0
        %1078 = vmatpush1.msra.mxu0 0.0
        %1079 = vmatprep.subr.mxu0 0.0
        %1080 = vmatpush1.msra.mxu0 0.0
        %1081 = vmatprep.subr.mxu0 0.0
        %1082 = vmatpush1.msra.mxu0 0.0
        %1083 = vmatprep.subr.mxu0 0.0
        %1084 = vmatpush1.msra.mxu0 0.0
        %1085 = vmatprep.subr.mxu0 0.0
        %1086 = vmatpush1.msra.mxu0 0.0
        %1087 = vmatprep.subr.mxu0 0.0
        %1088 = vmatpush1.msra.mxu0 0.0
        %1089 = vmatprep.subr.mxu0 0.0
        %1090 = vmatpush1.msra.mxu0 0.0
        %1091 = vmatprep.subr.mxu0 0.0
        %1092 = vmatpush1.msra.mxu0 0.0
        %1093 = vmatprep.subr.mxu0 0.0
        %1094 = vmatpush1.msra.mxu0 0.0
        %1095 = vmatprep.mubr.f32.mxu0 0.0
        %1096 = vmatmul.mubr.f32.gmra.mrb[0].mxu0 %v1029
        %v1097 = vpop.f32.mrb[0].mxu0
        %v1098 = vadd.f32 0.0, %v1097
        %v1099 = vpop.f32.mrb[0].mxu0
        %1100 = vdwg.mxu0
        %1102 = vrot.lane.b32.xlu0 %v1098, 24
        %v1103 = vpop.permute.xlu0 %1102
        %vm1105 = vcmask 261312
        %1106 = vst.msk [vmem:[#allocation3] sm:$0xff] %vm1105, %v1103
        %v1107 = vld [vmem:[#allocation3] sm:$0xff]
        %v1108 = vld [vmem:[#allocation9] sm:$0xff]
        %v1109 = vld [vmem:[#allocation9 + $0x8] sm:$0xff]
        %v1110 = vld [vmem:[#allocation9 + $0x10] sm:$0xff]
        %v1111 = vld [vmem:[#allocation9 + $0x18] sm:$0xff]
        %v1112 = vld [vmem:[%s5] sm:$0x1]
        %v1114 = vlaneseq
        %v1115 = vshrl.u32 %v1114, 7
        %v1116 = vsub.s32 0, %v1115
        %v1117 = vrot.slane %v1112, %v1116
        %v1120 = vsel %vm297, %v1107, 0
        %1122 = vmatprep.subr.mxu0 0.0
        %1123 = vmatpush1.msra.mxu0 %v1108
        %1124 = vmatprep.subr.mxu0 0.0
        %1125 = vmatpush1.msra.mxu0 %v1109
        %1126 = vmatprep.subr.mxu0 0.0
        %1127 = vmatpush1.msra.mxu0 %v1110
        %1128 = vmatprep.subr.mxu0 0.0
        %1129 = vmatpush1.msra.mxu0 %v1111
        %1130 = vmatprep.subr.mxu0 0.0
        %1131 = vmatpush1.msra.mxu0 0.0
        %1132 = vmatprep.subr.mxu0 0.0
        %1133 = vmatpush1.msra.mxu0 0.0
        %1134 = vmatprep.subr.mxu0 0.0
        %1135 = vmatpush1.msra.mxu0 0.0
        %1136 = vmatprep.subr.mxu0 0.0
        %1137 = vmatpush1.msra.mxu0 0.0
        %1138 = vmatprep.subr.mxu0 0.0
        %1139 = vmatpush1.msra.mxu0 0.0
        %1140 = vmatprep.subr.mxu0 0.0
        %1141 = vmatpush1.msra.mxu0 0.0
        %1142 = vmatprep.subr.mxu0 0.0
        %1143 = vmatpush1.msra.mxu0 0.0
        %1144 = vmatprep.subr.mxu0 0.0
        %1145 = vmatpush1.msra.mxu0 0.0
        %1146 = vmatprep.subr.mxu0 0.0
        %1147 = vmatpush1.msra.mxu0 0.0
        %1148 = vmatprep.subr.mxu0 0.0
        %1149 = vmatpush1.msra.mxu0 0.0
        %1150 = vmatprep.subr.mxu0 0.0
        %1151 = vmatpush1.msra.mxu0 0.0
        %1152 = vmatprep.subr.mxu0 0.0
        %1153 = vmatpush1.msra.mxu0 0.0
        %1154 = vmatprep.subr.mxu0 0.0
        %1155 = vmatpush1.msra.mxu0 0.0
        %1156 = vmatprep.subr.mxu0 0.0
        %1157 = vmatpush1.msra.mxu0 0.0
        %1158 = vmatprep.subr.mxu0 0.0
        %1159 = vmatpush1.msra.mxu0 0.0
        %1160 = vmatprep.subr.mxu0 0.0
        %1161 = vmatpush1.msra.mxu0 0.0
        %1162 = vmatprep.subr.mxu0 0.0
        %1163 = vmatpush1.msra.mxu0 0.0
        %1164 = vmatprep.subr.mxu0 0.0
        %1165 = vmatpush1.msra.mxu0 0.0
        %1166 = vmatprep.subr.mxu0 0.0
        %1167 = vmatpush1.msra.mxu0 0.0
        %1168 = vmatprep.subr.mxu0 0.0
        %1169 = vmatpush1.msra.mxu0 0.0
        %1170 = vmatprep.subr.mxu0 0.0
        %1171 = vmatpush1.msra.mxu0 0.0
        %1172 = vmatprep.subr.mxu0 0.0
        %1173 = vmatpush1.msra.mxu0 0.0
        %1174 = vmatprep.subr.mxu0 0.0
        %1175 = vmatpush1.msra.mxu0 0.0
        %1176 = vmatprep.subr.mxu0 0.0
        %1177 = vmatpush1.msra.mxu0 0.0
        %1178 = vmatprep.subr.mxu0 0.0
        %1179 = vmatpush1.msra.mxu0 0.0
        %1180 = vmatprep.subr.mxu0 0.0
        %1181 = vmatpush1.msra.mxu0 0.0
        %1182 = vmatprep.subr.mxu0 0.0
        %1183 = vmatpush1.msra.mxu0 0.0
        %1184 = vmatprep.subr.mxu0 0.0
        %1185 = vmatpush1.msra.mxu0 0.0
        %1186 = vmatprep.mubr.f32.mxu0 0.0
        %1187 = vmatmul.mubr.f32.gmra.mrb[0].mxu0 %v1120
        %v1188 = vpop.f32.mrb[0].mxu0
        %v1189 = vadd.f32 %v1117, %v1188
        %v1190 = vpop.f32.mrb[0].mxu0
        %1191 = vdwg.mxu0
        %v1192 = vld [vmem:[%s259] sm:$0xff]
        %v1193 = vadd.f32 %v1189, %v1192
        %1194 = vst.msk [vmem:[%s295] sm:$0xff] %vm297, %v1193
        %s1195 = sand.u32 %s163, 1
        %s1196 = scalar_lea.sflag [#allocation6], %s1195
        %s1197 = sand.u32 %s163, 1
        %s1198 = smul.addr %s1197, 8
        %s1199 = scalar_lea.vmem [#allocation10], %s1198
        // Predicated region
        $region57: #{tpu_custom_call.1} parent=43 // pred_check
          %p1200 = pneg %p173
        $region58: #{tpu_custom_call.1} parent=43 // pred_check_branch
          %1202 = sbr.rel (%p1200) target = $region60
        $region59: #{tpu_custom_call.1} parent=43 // pred_region
          %s1204 = ssub.s32 128, 128
          %1205 = vsyncadd %s1196, %s1204
          %s1206 = smul.addr %s24, 128
          %s1207 = scalar_lea.hbm %s6, %s1206
          %s1209 = sshll.u32 %s1199, 4
          %s1210 = int_to_ptr.vmem [resolvable:$true] %s1209
          %1212 = dma.vmem_to_hbm [thread:$0]  %s1210, 128, %s1207, %s1196
        $region60: #{tpu_custom_call.1} parent=43 // pred_fallthru
          _
      $region44: #{tpu_custom_call.1} parent=5 // pred_fallthru
        _
      %p1213 = scmp.le.s32.totalorder 2, %s19
      // Predicated region
      $region61: #{tpu_custom_call.1} parent=5 // pred_check
        %p1214 = pneg %p1213
      $region62: #{tpu_custom_call.1} parent=5 // pred_check_branch
        %1216 = sbr.rel (%p1214) target = $region64
      $region63: #{tpu_custom_call.1} parent=5 // pred_region
        %s1217 = ssub.s32 %s19, 2
        // Predicated region
        $region65: #{tpu_custom_call.1} parent=63 // pred_check
          %p1218 = pneg %p179
        $region66: #{tpu_custom_call.1} parent=63 // pred_check_branch
          %1220 = sbr.rel (%p1218) target = $region68
        $region67: #{tpu_custom_call.1} parent=63 // pred_region
          %s1221 = sand.u32 %s164, 1
          %s1222 = scalar_lea.sflag [#allocation6], %s1221
          %s1223 = sand.u32 %s164, 1
          %s1224 = smul.addr %s1223, 8
          %s1225 = scalar_lea.vmem [#allocation10], %s1224
          %1226 = dma.done %s1222, 128
        $region68: #{tpu_custom_call.1} parent=63 // pred_fallthru
          _
      $region64: #{tpu_custom_call.1} parent=5 // pred_fallthru
        _
    $region6: #{tpu_custom_call.1} parent=1 // loop_footer
      %s23 = sadd.s32 1, %s19
    $region7: #{tpu_custom_call.1} parent=1 // loop_footer_branch
      %18 = sbr.rel target = $region3
    $region8: #{tpu_custom_call.1} parent=1 // loop_exit
      _
    %1227 = vsyncpa [#allocation5], 1
    %s1228 = scalar_lea.sflag [#allocation5], 1
    %1229 = vsyncpa %s1228, 1
    %1230 = vsyncpa [#allocation8], 1
    %1231 = vsyncpa [#allocation6], 1
    %s1232 = scalar_lea.sflag [#allocation6], 1
    %1233 = vsyncpa %s1232, 1

</llo_original>
